<compile_context>
chip_gen: v6e
topology: v6e:2x2x1
jax: 0.10.0
libtpu: 0.0.40
codegen_flags: <defaults>
</compile_context>

<pallas_src>
import functools

import jax
import jax.numpy as jnp
from jax.experimental import pallas as pl
from jax.experimental.pallas import tpu as pltpu


def _round_up(n, m):
    return (n + m - 1) // m * m


def _pick_vmem_limit():
    """~3/4 of physical VMEM per TC, capped at 100 MiB (48 MiB v7x, 96 MiB v5e/v6e)."""
    try:
        cap = pltpu.get_tpu_info().vmem_capacity_bytes
    except Exception:
        cap = 64 * 1024 * 1024          # conservative (v7x-sized) fallback
    return int(min(cap * 3 // 4, 100 * 1024 * 1024))


# Keep the resident support (x2 pipeline buffers) comfortably inside every
# generation's VMEM; above this, fall back to streaming (tk, F) support tiles.
_RESIDENT_SUPPORT_BYTES = 16 * 1024 * 1024


def _accumulate(mask_ref, adj_ref, s_ref, acc_ref, *, tk, gk, resident):
    """acc += adj_tile @ support_tile, skipping all-zero adjacency blocks."""
    i = pl.program_id(0)
    k = pl.program_id(1)

    @pl.when(k == 0)
    def _init():
        acc_ref[...] = jnp.zeros_like(acc_ref)

    @pl.when(mask_ref[i * gk + k] != 0)
    def _mac():
        if resident:                       # support fully VMEM-resident
            start = pl.multiple_of(k * tk, tk)
            s_tile = s_ref[pl.ds(start, tk), :]
        else:                              # streamed (tk, F) tile
            s_tile = s_ref[...]
        acc_ref[...] += jnp.dot(adj_ref[...], s_tile,
                                preferred_element_type=jnp.float32)


def _layer1_kernel(mask_ref, adj_ref, s_ref, b_ref, w2_ref, out_ref, acc_ref,
                   *, tk, gk, resident):
    """Row tile of  s2 = relu(adj @ support1 + b1) @ W2  (layer-2 weight fused)."""
    _accumulate(mask_ref, adj_ref, s_ref, acc_ref, tk=tk, gk=gk,
                resident=resident)

    @pl.when(pl.program_id(1) == pl.num_programs(1) - 1)
    def _epilogue():
        h = jnp.maximum(acc_ref[...] + b_ref[...], 0.0)
        # TODO(synk): dropout is identity in eval mode; training would apply
        # pltpu.prng_seed + pltpu.stateful_bernoulli to h here.
        out_ref[...] = jnp.dot(h.astype(w2_ref.dtype), w2_ref[...],
                               preferred_element_type=jnp.float32
                               ).astype(out_ref.dtype)


def _layer2_kernel(mask_ref, adj_ref, s_ref, b_ref, out_ref, acc_ref,
                   *, tk, gk, resident):
    """Row tile of  out = log_softmax(adj @ s2 + b2); padded class columns
    carry a -1e30 bias so no explicit mask is needed."""
    _accumulate(mask_ref, adj_ref, s_ref, acc_ref, tk=tk, gk=gk,
                resident=resident)

    @pl.when(pl.program_id(1) == pl.num_programs(1) - 1)
    def _epilogue():
        z = acc_ref[...] + b_ref[...]
        m = jnp.max(z, axis=1, keepdims=True)
        shifted = z - m
        lse = jnp.log(jnp.sum(jnp.exp(shifted), axis=1, keepdims=True))
        out_ref[...] = (shifted - lse).astype(out_ref.dtype)


def _adj_propagate(block_mask, adj, support, bias, fused_w, *, tm, tk,
                   out_dtype, vmem_limit):
    """One pallas_call computing  epilogue(adj @ support + bias [@ fused_w])."""
    n_pad = adj.shape[0]
    fin = support.shape[1]
    fout = fused_w.shape[1] if fused_w is not None else fin
    gm, gk = n_pad // tm, n_pad // tk

    resident = (2 * support.size * support.dtype.itemsize
                <= min(_RESIDENT_SUPPORT_BYTES, vmem_limit // 3))
    if resident:
        s_spec = pl.BlockSpec((n_pad, fin), lambda i, k, m: (0, 0))
    else:
        s_spec = pl.BlockSpec((tk, fin), lambda i, k, m: (k, 0))

    in_specs = [
        pl.BlockSpec((tm, tk), lambda i, k, m: (i, k)),   # streamed adjacency
        s_spec,                                           # support matrix
        pl.BlockSpec((1, fin), lambda i, k, m: (0, 0)),   # bias row (f32)
    ]
    operands = [adj, support, bias]
    if fused_w is not None:
        in_specs.append(pl.BlockSpec((fin, fout), lambda i, k, m: (0, 0)))
        operands.append(fused_w)
        kernel = functools.partial(_layer1_kernel, tk=tk, gk=gk,
                                   resident=resident)
    else:
        kernel = functools.partial(_layer2_kernel, tk=tk, gk=gk,
                                   resident=resident)

    flops = 2 * n_pad * n_pad * fin
    transcendentals = 0
    if fused_w is not None:
        flops += 2 * n_pad * fin * fout
    else:
        transcendentals = n_pad * fout
    bytes_accessed = (adj.size * adj.dtype.itemsize
                      + support.size * support.dtype.itemsize
                      * (1 if resident else gm)
                      + n_pad * fout * jnp.dtype(out_dtype).itemsize)

    return pl.pallas_call(
        kernel,
        out_shape=jax.ShapeDtypeStruct((n_pad, fout), out_dtype),
        grid_spec=pltpu.PrefetchScalarGridSpec(
            num_scalar_prefetch=1,
            grid=(gm, gk),
            in_specs=in_specs,
            out_specs=pl.BlockSpec((tm, fout), lambda i, k, m: (i, 0)),
            scratch_shapes=[pltpu.VMEM((tm, fin), jnp.float32)],
        ),
        compiler_params=pltpu.CompilerParams(
            dimension_semantics=("parallel", "arbitrary"),
            vmem_limit_bytes=vmem_limit,
        ),
        cost_estimate=pl.CostEstimate(
            flops=flops, transcendentals=transcendentals,
            bytes_accessed=bytes_accessed),
    )(block_mask, *operands)


def gcn_forward(x, adj, w1, b1, w2, b2, *, tm=256, tk=512):
    """Eval-mode GCN: log_softmax(adj @ relu(adj @ (x @ W1) + b1) @ W2 + b2)."""
    n, nfeat = x.shape
    nhid = w1.shape[1]
    nclass = w2.shape[1]

    n_pad = _round_up(n, tm)
    if n_pad % tk != 0:              # small graphs: fall back to square tiles
        tk = tm
    h_pad = _round_up(nhid, 128)     # lane-dense hidden dim
    c_pad = _round_up(nclass, 128)   # lane-dense class dim

    bf16 = jnp.bfloat16
    f32 = jnp.float32

    # Streamed operands in bf16; zero padding keeps padded rows/cols inert.
    adj_p = jnp.zeros((n_pad, n_pad), bf16).at[:n, :n].set(adj.astype(bf16))

    # Support-first prologue: support1 = x @ W1 (tiny matmul in f32, cast once
    # to bf16 for MXU streaming).
    support1 = x.astype(f32) @ w1.astype(f32)
    s1_p = jnp.zeros((n_pad, h_pad), bf16).at[:n, :nhid].set(
        support1.astype(bf16))

    b1_p = jnp.zeros((1, h_pad), f32).at[:, :nhid].set(b1.astype(f32))
    w2_p = jnp.zeros((h_pad, c_pad), bf16).at[:nhid, :nclass].set(
        w2.astype(bf16))
    # Bake the class-padding mask into the layer-2 bias: padded columns get
    # -1e30 so the log-softmax epilogue needs no iota/compare/select.
    b2_p = jnp.full((1, c_pad), -1e30, f32).at[:, :nclass].set(b2.astype(f32))

    # Block-sparsity mask over (tm, tk) adjacency tiles (prefetched to SMEM).
    gm, gk = n_pad // tm, n_pad // tk
    block_mask = jnp.any(adj_p.reshape(gm, tm, gk, tk) != 0,
                         axis=(1, 3)).astype(jnp.int32).reshape(-1)
    # TODO(synk): for Cora/PubMed-scale sparsity, a data-dependent index_map
    # over per-row-tile nonzero column-block lists would also skip the adj DMA.

    vmem_limit = _pick_vmem_limit()

    # Layer 1 (+ fused layer-2 weight): s2 = relu(adj @ support1 + b1) @ W2.
    s2 = _adj_propagate(block_mask, adj_p, s1_p, b1_p, w2_p,
                        tm=tm, tk=tk, out_dtype=bf16, vmem_limit=vmem_limit)

    # Layer 2: out = log_softmax(adj @ s2 + b2) over the real class columns.
    out = _adj_propagate(block_mask, adj_p, s2, b2_p, None,
                         tm=tm, tk=tk, out_dtype=f32, vmem_limit=vmem_limit)
    return out[:n, :nclass]


def gcn_reference(x, adj, w1, b1, w2, b2):
    h = jnp.maximum(adj @ (x @ w1) + b1, 0.0)
    z = adj @ (h @ w2) + b2
    return jax.nn.log_softmax(z, axis=1)


def init_gc_params(key, fan_in, fan_out):
    # Kipf-style uniform(-1/sqrt(fan_out), 1/sqrt(fan_out)) init, deterministic.
    kw, kb = jax.random.split(key)
    bound = 1.0 / jnp.sqrt(jnp.float32(fan_out))
    w = jax.random.uniform(kw, (fan_in, fan_out), jnp.float32, -bound, bound)
    b = jax.random.uniform(kb, (1, fan_out), jnp.float32, -bound, bound)
    return w, b


if __name__ == "__main__":
    # Small synthetic graph sized to exercise the 2-D grid:
    # n_pad=1024 -> 4 row tiles of 256 (even count, good for v7x's 2 TCs) x
    # 2 contraction tiles of 512.
    N, nfeat, nhid, nclass = 1024, 64, 64, 7
    dropout = 0.5  # unused in eval mode

    key = jax.random.PRNGKey(0)
    kx, kadj, k1, k2 = jax.random.split(key, 4)

    x = jax.random.normal(kx, (N, nfeat), jnp.float32)

    # Symmetric adjacency with self-loops, row-normalized (standard GCN preproc).
    a = (jax.random.uniform(kadj, (N, N)) < 0.05).astype(jnp.float32)
    a = jnp.maximum(a, a.T) + jnp.eye(N, dtype=jnp.float32)
    adj = a / jnp.sum(a, axis=1, keepdims=True)

    w1, b1 = init_gc_params(k1, nfeat, nhid)
    w2, b2 = init_gc_params(k2, nhid, nclass)

    out = gcn_forward(x, adj, w1, b1, w2, b2)
    out = jax.block_until_ready(out)

    ref = gcn_reference(x, adj, w1, b1, w2, b2)
    assert out.shape == (N, nclass)
    assert bool(jnp.all(jnp.isfinite(out)))
    # bf16 MXU streaming (f32 accumulation) -> looser tolerance than pure f32.
    assert jnp.allclose(out, ref, atol=3e-2, rtol=3e-2), "mismatch vs JAX reference"

    print("KERNEL_OK")
</pallas_src>

<mosaic_0001>
module attributes {stable_mosaic.version = 11 : i64} {
  func.func @_layer1_kernel(%arg0: i32, %arg1: i32, %arg2: memref<8xi32, #tpu.memory_space<smem>>, %arg3: memref<256x512xbf16, #tpu.memory_space<vmem>>, %arg4: memref<1024x128xbf16, #tpu.memory_space<vmem>>, %arg5: memref<1x128xf32, #tpu.memory_space<vmem>>, %arg6: memref<128x128xbf16, #tpu.memory_space<vmem>>, %arg7: memref<256x128xbf16, #tpu.memory_space<vmem>>, %arg8: memref<256x128xf32, #tpu.memory_space<vmem>>) attributes {dimension_semantics = [#tpu.dimension_semantics<parallel>, #tpu.dimension_semantics<arbitrary>], iteration_bounds = array<i64: 4, 2>, scalar_prefetch = 1 : i64, scratch_operands = 1 : i64, tpu.core_type = #tpu.core_type<tc>, window_params = [{transform_indices = @transform_0, window_bounds = array<i64: 256, 512>}, {pipeline_mode = #tpu.pipeline_mode<synchronous>, transform_indices = @transform_1, window_bounds = array<i64: 1024, 128>}, {pipeline_mode = #tpu.pipeline_mode<synchronous>, transform_indices = @transform_2, window_bounds = array<i64: 1, 128>}, {pipeline_mode = #tpu.pipeline_mode<synchronous>, transform_indices = @transform_3, window_bounds = array<i64: 128, 128>}, {transform_indices = @transform_4, window_bounds = array<i64: 256, 128>}]} {
    %c0_i32 = arith.constant 0 : i32
    %0 = arith.cmpi eq, %arg1, %c0_i32 : i32
    %1 = arith.extui %0 : i1 to i32
    %c0_i32_0 = arith.constant 0 : i32
    %2 = arith.cmpi ne, %1, %c0_i32_0 : i32
    scf.if %2 {
      %cst = arith.constant 0.000000e+00 : f32
      %13 = vector.broadcast %cst : f32 to vector<256x128xf32>
      %c0 = arith.constant 0 : index
      %c0_4 = arith.constant 0 : index
      %14 = vector.load %arg8[%c0, %c0_4] : memref<256x128xf32, #tpu.memory_space<vmem>>, vector<256x128xf32>
      tpu.vector_store %arg8[%c0, %c0_4], %13 {strides = array<i32>} : memref<256x128xf32, #tpu.memory_space<vmem>>, vector<256x128xf32>,
    } else {
    }
    %c2_i32 = arith.constant 2 : i32
    %3 = arith.muli %arg0, %c2_i32 : i32
    %4 = arith.addi %3, %arg1 : i32
    %5 = arith.index_cast %4 : i32 to index
    %6 = memref.load %arg2[%5] : memref<8xi32, #tpu.memory_space<smem>>
    %c0_i32_1 = arith.constant 0 : i32
    %7 = arith.cmpi ne, %6, %c0_i32_1 : i32
    %8 = arith.extui %7 : i1 to i32
    %c0_i32_2 = arith.constant 0 : i32
    %9 = arith.cmpi ne, %8, %c0_i32_2 : i32
    scf.if %9 {
      %c512_i32 = arith.constant 512 : i32
      %13 = arith.muli %arg1, %c512_i32 : i32
      %14 = tpu.assume_multiple %13, 512 : i32
      %15 = arith.index_cast %14 : i32 to index
      %c0 = arith.constant 0 : index
      %16 = vector.load %arg4[%15, %c0] : memref<1024x128xbf16, #tpu.memory_space<vmem>>, vector<512x128xbf16>
      %c0_4 = arith.constant 0 : index
      %c0_5 = arith.constant 0 : index
      %17 = vector.load %arg8[%c0_4, %c0_5] : memref<256x128xf32, #tpu.memory_space<vmem>>, vector<256x128xf32>
      %c0_6 = arith.constant 0 : index
      %c0_7 = arith.constant 0 : index
      %18 = vector.load %arg3[%c0_6, %c0_7] : memref<256x512xbf16, #tpu.memory_space<vmem>>, vector<256x512xbf16>
      %cst = arith.constant dense<0.000000e+00> : vector<256x128xf32>
      %19 = tpu.matmul %18, %16, %cst {dimension_numbers = #tpu.dot_dimension_numbers<[1], [0], [0], [1], [0, 0, 1, 1], [], []>} : vector<256x512xbf16>, vector<512x128xbf16>, vector<256x128xf32> -> vector<256x128xf32>
      %20 = arith.addf %17, %19 : vector<256x128xf32>
      %c0_8 = arith.constant 0 : index
      %c0_9 = arith.constant 0 : index
      %21 = vector.load %arg8[%c0_8, %c0_9] : memref<256x128xf32, #tpu.memory_space<vmem>>, vector<256x128xf32>
      tpu.vector_store %arg8[%c0_8, %c0_9], %20 {strides = array<i32>} : memref<256x128xf32, #tpu.memory_space<vmem>>, vector<256x128xf32>,
    } else {
    }
    %c1_i32 = arith.constant 1 : i32
    %10 = arith.cmpi eq, %arg1, %c1_i32 : i32
    %11 = arith.extui %10 : i1 to i32
    %c0_i32_3 = arith.constant 0 : i32
    %12 = arith.cmpi ne, %11, %c0_i32_3 : i32
    scf.if %12 {
      %c0 = arith.constant 0 : index
      %c0_4 = arith.constant 0 : index
      %13 = vector.load %arg8[%c0, %c0_4] : memref<256x128xf32, #tpu.memory_space<vmem>>, vector<256x128xf32>
      %c0_5 = arith.constant 0 : index
      %c0_6 = arith.constant 0 : index
      %14 = vector.load %arg5[%c0_5, %c0_6] : memref<1x128xf32, #tpu.memory_space<vmem>>, vector<1x128xf32>
      %15 = vector.broadcast %14 : vector<1x128xf32> to vector<256x128xf32>
      %16 = arith.addf %13, %15 : vector<256x128xf32>
      %cst = arith.constant 0.000000e+00 : f32
      %17 = vector.broadcast %cst : f32 to vector<256x128xf32>
      %18 = arith.maximumf %16, %17 : vector<256x128xf32>
      %19 = arith.truncf %18 : vector<256x128xf32> to vector<256x128xbf16>
      %c0_7 = arith.constant 0 : index
      %c0_8 = arith.constant 0 : index
      %20 = vector.load %arg6[%c0_7, %c0_8] : memref<128x128xbf16, #tpu.memory_space<vmem>>, vector<128x128xbf16>
      %cst_9 = arith.constant dense<0.000000e+00> : vector<256x128xf32>
      %21 = tpu.matmul %19, %20, %cst_9 {dimension_numbers = #tpu.dot_dimension_numbers<[1], [0], [0], [1], [0, 0, 1, 1], [], []>} : vector<256x128xbf16>, vector<128x128xbf16>, vector<256x128xf32> -> vector<256x128xf32>
      %22 = arith.truncf %21 : vector<256x128xf32> to vector<256x128xbf16>
      %c0_10 = arith.constant 0 : index
      %c0_11 = arith.constant 0 : index
      %23 = vector.load %arg7[%c0_10, %c0_11] : memref<256x128xbf16, #tpu.memory_space<vmem>>, vector<256x128xbf16>
      tpu.vector_store %arg7[%c0_10, %c0_11], %22 {strides = array<i32>} : memref<256x128xbf16, #tpu.memory_space<vmem>>, vector<256x128xbf16>,
    } else {
    }
    return
  }
  func.func @transform_0(%arg0: i32, %arg1: i32, %arg2: memref<8xi32, #tpu.memory_space<smem>>) -> (i32, i32) {
    %c0_i32 = arith.constant 0 : i32
    return %arg0, %arg1 : i32, i32
  }
  func.func @transform_1(%arg0: i32, %arg1: i32, %arg2: memref<8xi32, #tpu.memory_space<smem>>) -> (i32, i32) {
    %c0_i32 = arith.constant 0 : i32
    %c0_i32_0 = arith.constant 0 : i32
    %c0_i32_1 = arith.constant 0 : i32
    return %c0_i32, %c0_i32_0 : i32, i32
  }
  func.func @transform_2(%arg0: i32, %arg1: i32, %arg2: memref<8xi32, #tpu.memory_space<smem>>) -> (i32, i32) {
    %c0_i32 = arith.constant 0 : i32
    %c0_i32_0 = arith.constant 0 : i32
    %c0_i32_1 = arith.constant 0 : i32
    return %c0_i32, %c0_i32_0 : i32, i32
  }
  func.func @transform_3(%arg0: i32, %arg1: i32, %arg2: memref<8xi32, #tpu.memory_space<smem>>) -> (i32, i32) {
    %c0_i32 = arith.constant 0 : i32
    %c0_i32_0 = arith.constant 0 : i32
    %c0_i32_1 = arith.constant 0 : i32
    return %c0_i32, %c0_i32_0 : i32, i32
  }
  func.func @transform_4(%arg0: i32, %arg1: i32, %arg2: memref<8xi32, #tpu.memory_space<smem>>) -> (i32, i32) {
    %c0_i32 = arith.constant 0 : i32
    %c0_i32_0 = arith.constant 0 : i32
    return %arg0, %c0_i32 : i32, i32
  }
}

</mosaic_0001>

<llo_original>
// kernel: tpu_custom_call.1
$region0: #{tpu_custom_call.1}
  #allocation0 [shape = 'u32[]', space=smem, size = 0x4, offset = 0x4, fixed_abs, tag = 'smem constant byte address 0x4 - core index']
  #allocation1 [shape = 'u32[144,128]{1,0:T(1,128)}', space=vmem, size = 0x12000, scoped, tag = 'internal scratch']
  #allocation2 [shape = 'f32[256,128]{1,0:T(8,128)}', space=vmem, size = 0x20000, scoped, tag = 'scratch operand']
  #allocation3 [shape = 's32[1]{0}', space=sflag, size = 0x4, scoped, tag = 'scoped memory for tpu_custom_call.1']
  #allocation4 [shape = 'u8[512]{0}', space=smem, size = 0x200, scoped, tag = 'prefetched SMEM operand 0']
  %s0 = inlined_call_operand.hbm [shape: s32[8], index: 0, kind: input, shape index: {}]
  %s1 = inlined_call_operand.hbm [shape: bf16[1024,1024], index: 1, kind: input, shape index: {}]
  %s2 = inlined_call_operand.hbm [shape: bf16[1024,128], index: 2, kind: input, shape index: {}]
  %s3 = inlined_call_operand.hbm [shape: f32[1,128], index: 3, kind: input, shape index: {}]
  %s4 = inlined_call_operand.hbm [shape: bf16[128,128], index: 4, kind: input, shape index: {}]
  %s5 = inlined_call_operand.hbm [shape: bf16[1024,128], index: 5, kind: output, shape index: {}]
  %s6 = sld [smem:[#allocation0]]
  $region77: #{tpu_custom_call.1} parent=0
    _
  %s8 = ssub.s32 1, %s6
  %s9 = scalar_select 0, %s8, %s6
  %11 = dma.hbm_to_smem %s0, 16, [#allocation4], [#allocation3]
  %12 = dma.done [#allocation3], 16
  %13 = sfence
  $region1: #{tpu_custom_call.1} parent=0
    #allocation5 [shape = 'u8[524288]{0}', space=vmem, size = 0x80000, scoped, tag = 'input window, operand 1']
    #allocation6 [shape = 's32[2]{0}', space=sflag, size = 0x8, scoped, tag = 'scoped memory for tpu_custom_call.1']
    #allocation7 [shape = 's32[2]{0}', space=sflag, size = 0x8, scoped, tag = 'scoped memory for tpu_custom_call.1']
    #allocation8 [shape = 'u8[262144]{0}', space=vmem, size = 0x40000, scoped, tag = 'input window, operand 2, single buffered']
    #allocation9 [shape = 's32[1]{0}', space=sflag, size = 0x4, scoped, tag = 'scoped memory for tpu_custom_call.1']
    #allocation10 [shape = 'u8[512]{0}', space=vmem, size = 0x400, scoped, tag = 'input window, operand 3, single buffered']
    #allocation11 [shape = 'u8[32768]{0}', space=vmem, size = 0x8000, scoped, tag = 'input window, operand 4, single buffered']
    #allocation12 [shape = 's32[1]{0}', space=sflag, size = 0x4, scoped, tag = 'scoped memory for tpu_custom_call.1']
    #allocation13 [shape = 'u8[131072]{0}', space=vmem, size = 0x20000, scoped, tag = 'output window, operand 0']
    %14 = vsyncpa [#allocation6], 0
    %s15 = scalar_lea.sflag [#allocation6], 1
    %16 = vsyncpa %s15, 0
    %17 = vsyncpa [#allocation9], 0
    %18 = vsyncpa [#allocation12], 0
    %19 = vsyncpa [#allocation7], 0
    %s20 = scalar_lea.sflag [#allocation7], 1
    %21 = vsyncpa %s20, 0
    loop: start=0, step=1, limit=10
    $region2: #{tpu_custom_call.1} parent=1 // loop_pre_header
      _
    $region3: #{tpu_custom_call.1} parent=1 // loop_header
      %s23 = sphi 0, %s27
      %p24 = scmp.ge.s32.totalorder %s23, 10
      %s30 = sphi 0, %s42
      %s31 = sphi 0, %s38
      %s32 = sphi 0, %s30
      %s33 = sphi 0, %s31
      %s34 = sphi 0, %s32
      %s35 = sphi 0, %s33
      %s47 = sphi 0, %s49
      %s50 = sphi 0, %s47
      %s51 = sphi 0, %s50
      %s67 = sphi 0, %s51
      %s71 = sphi 0, %s71
      %s73 = sphi 0, %s71
      %s74 = sphi 0, %s73
      %s88 = sphi 0, %s74
      %s92 = sphi 0, %s92
      %s94 = sphi 0, %s92
      %s95 = sphi 0, %s94
      %s109 = sphi 0, %s95
      %s113 = sphi 0, %s113
      %s115 = sphi 0, %s113
      %s116 = sphi 0, %s115
      %s130 = sphi 0, %s116
      %s136 = sphi 0, %s138
      %s139 = sphi 0, %s136
      %s140 = sphi 0, %s139
      %s156 = sphi 0, %s140
    $region4: #{tpu_custom_call.1} parent=1 // loop_header_branch
      %26 = sbr.rel (%p24) target = $region8
    $region5: #{tpu_custom_call.1} parent=1 // loop_body
      %s28 = ssub.s32 %s23, 1
      %s29 = ssub.s32 %s23, 2
      %s36 = sadd.s32 1, %s31
      %p37 = scmp.ge.s32.totalorder %s36, 2
      %s38 = scalar_select %p37, 0, %s36
      %s39 = sadd.s32 1, %s30
      %s40 = scalar_select %p37, %s39, %s30
      %p41 = scmp.ge.s32.totalorder %s40, 4
      %s42 = scalar_select %p41, 0, %s40
      %s43 = ssub.s32 %s30, %s42
      %s44 = ssub.s32 %s31, %s38
      %s45 = sor.u32 %s43, %s44
      %p46 = scmp.eq.s32.totalorder %s45, 0
      %s48 = sadd.s32 %s47, 1
      %s49 = scalar_select %p46, %s47, %s48
      %p52 = pneg %p46
      %p53 = scmp.eq.s32.totalorder %s23, 7
      %p54 = por %p52, %p53
      %p55 = scmp.ne.s32.totalorder %s47, %s50
      %p56 = scmp.eq.s32.totalorder %s23, 0
      %p57 = por %p55, %p56
      %p58 = scmp.ne.s32.totalorder %s47, %s50
      %p59 = scmp.eq.s32.totalorder %s28, 7
      %p60 = por %p58, %p59
      %p61 = scmp.ne.s32.totalorder %s50, %s51
      %p62 = scmp.eq.s32.totalorder %s28, 0
      %p63 = por %p61, %p62
      %p64 = scmp.ne.s32.totalorder %s50, %s51
      %p65 = scmp.eq.s32.totalorder %s29, 7
      %p66 = por %p64, %p65
      %p68 = scmp.ne.s32.totalorder %s51, %s67
      %p69 = scmp.eq.s32.totalorder %s29, 0
      %p70 = por %p68, %p69
      %s72 = sadd.s32 %s71, 1
      %p75 = scmp.eq.s32.totalorder %s23, 7
      %p76 = scmp.ne.s32.totalorder %s71, %s73
      %p77 = scmp.eq.s32.totalorder %s23, 0
      %p78 = por %p76, %p77
      %p79 = scmp.ne.s32.totalorder %s71, %s73
      %p80 = scmp.eq.s32.totalorder %s28, 7
      %p81 = por %p79, %p80
      %p82 = scmp.ne.s32.totalorder %s73, %s74
      %p83 = scmp.eq.s32.totalorder %s28, 0
      %p84 = por %p82, %p83
      %p85 = scmp.ne.s32.totalorder %s73, %s74
      %p86 = scmp.eq.s32.totalorder %s29, 7
      %p87 = por %p85, %p86
      %p89 = scmp.ne.s32.totalorder %s74, %s88
      %p90 = scmp.eq.s32.totalorder %s29, 0
      %p91 = por %p89, %p90
      %s93 = sadd.s32 %s92, 1
      %p96 = scmp.eq.s32.totalorder %s23, 7
      %p97 = scmp.ne.s32.totalorder %s92, %s94
      %p98 = scmp.eq.s32.totalorder %s23, 0
      %p99 = por %p97, %p98
      %p100 = scmp.ne.s32.totalorder %s92, %s94
      %p101 = scmp.eq.s32.totalorder %s28, 7
      %p102 = por %p100, %p101
      %p103 = scmp.ne.s32.totalorder %s94, %s95
      %p104 = scmp.eq.s32.totalorder %s28, 0
      %p105 = por %p103, %p104
      %p106 = scmp.ne.s32.totalorder %s94, %s95
      %p107 = scmp.eq.s32.totalorder %s29, 7
      %p108 = por %p106, %p107
      %p110 = scmp.ne.s32.totalorder %s95, %s109
      %p111 = scmp.eq.s32.totalorder %s29, 0
      %p112 = por %p110, %p111
      %s114 = sadd.s32 %s113, 1
      %p117 = scmp.eq.s32.totalorder %s23, 7
      %p118 = scmp.ne.s32.totalorder %s113, %s115
      %p119 = scmp.eq.s32.totalorder %s23, 0
      %p120 = por %p118, %p119
      %p121 = scmp.ne.s32.totalorder %s113, %s115
      %p122 = scmp.eq.s32.totalorder %s28, 7
      %p123 = por %p121, %p122
      %p124 = scmp.ne.s32.totalorder %s115, %s116
      %p125 = scmp.eq.s32.totalorder %s28, 0
      %p126 = por %p124, %p125
      %p127 = scmp.ne.s32.totalorder %s115, %s116
      %p128 = scmp.eq.s32.totalorder %s29, 7
      %p129 = por %p127, %p128
      %p131 = scmp.ne.s32.totalorder %s116, %s130
      %p132 = scmp.eq.s32.totalorder %s29, 0
      %p133 = por %p131, %p132
      %s134 = ssub.s32 %s30, %s42
      %p135 = scmp.eq.s32.totalorder %s134, 0
      %s137 = sadd.s32 %s136, 1
      %s138 = scalar_select %p135, %s136, %s137
      %p141 = pneg %p135
      %p142 = scmp.eq.s32.totalorder %s23, 7
      %p143 = por %p141, %p142
      %p144 = scmp.ne.s32.totalorder %s136, %s139
      %p145 = scmp.eq.s32.totalorder %s23, 0
      %p146 = por %p144, %p145
      %p147 = scmp.ne.s32.totalorder %s136, %s139
      %p148 = scmp.eq.s32.totalorder %s28, 7
      %p149 = por %p147, %p148
      %p150 = scmp.ne.s32.totalorder %s139, %s140
      %p151 = scmp.eq.s32.totalorder %s28, 0
      %p152 = por %p150, %p151
      %p153 = scmp.ne.s32.totalorder %s139, %s140
      %p154 = scmp.eq.s32.totalorder %s29, 7
      %p155 = por %p153, %p154
      %p157 = scmp.ne.s32.totalorder %s140, %s156
      %p158 = scmp.eq.s32.totalorder %s29, 0
      %p159 = por %p157, %p158
      %p160 = scmp.le.s32.totalorder 1, %s23
      %p161 = scmp.lt.s32.totalorder %s23, 9
      %p162 = pnand %p160, %p161
      %p163 = pneg %p162
      // Predicated region
      $region9: #{tpu_custom_call.1} parent=5 // pred_check
        _
      $region10: #{tpu_custom_call.1} parent=5 // pred_check_branch
        %165 = sbr.rel (%p162) target = $region12
      $region11: #{tpu_custom_call.1} parent=5 // pred_region
        %s166 = ssub.s32 %s23, 1
        // Predicated region
        $region13: #{tpu_custom_call.1} parent=11 // pred_check
          %p167 = pneg %p84
        $region14: #{tpu_custom_call.1} parent=11 // pred_check_branch
          %169 = sbr.rel (%p167) target = $region16
        $region15: #{tpu_custom_call.1} parent=11 // pred_region
          %s171 = ssub.s32 8192, 8192
          %172 = vsyncadd [#allocation9], %s171
          %s173 = sshll.u32 [#allocation8], 4
          %s174 = int_to_ptr.vmem [resolvable:$true] %s173
          %179 = dma.hbm_to_vmem [thread:$0]  %s2, 8192, %s174, [#allocation9], 64, 64, 4
        $region16: #{tpu_custom_call.1} parent=11 // pred_fallthru
          _
        // Predicated region
        $region17: #{tpu_custom_call.1} parent=11 // pred_check
          %p180 = pneg %p105
        $region18: #{tpu_custom_call.1} parent=11 // pred_check_branch
          %182 = sbr.rel (%p180) target = $region20
        $region19: #{tpu_custom_call.1} parent=11 // pred_region
          %s184 = ssub.s32 16, 16
          %185 = vsyncadd [#allocation9], %s184
          %s187 = sshll.u32 [#allocation10], 4
          %s188 = int_to_ptr.vmem [resolvable:$true] %s187
          %190 = dma.hbm_to_vmem [thread:$0]  %s3, 16, %s188, [#allocation9]
        $region20: #{tpu_custom_call.1} parent=11 // pred_fallthru
          _
        // Predicated region
        $region21: #{tpu_custom_call.1} parent=11 // pred_check
          %p191 = pneg %p126
        $region22: #{tpu_custom_call.1} parent=11 // pred_check_branch
          %193 = sbr.rel (%p191) target = $region24
        $region23: #{tpu_custom_call.1} parent=11 // pred_region
          %s195 = ssub.s32 1024, 1024
          %196 = vsyncadd [#allocation12], %s195
          %s197 = sshll.u32 [#allocation11], 4
          %s198 = int_to_ptr.vmem [resolvable:$true] %s197
          %203 = dma.hbm_to_vmem [thread:$0]  %s4, 1024, %s198, [#allocation12], 64, 64, 4
        $region24: #{tpu_custom_call.1} parent=11 // pred_fallthru
          _
      $region12: #{tpu_custom_call.1} parent=5 // pred_fallthru
        _
      %p204 = scmp.lt.s32.totalorder %s23, 8
      // Predicated region
      $region25: #{tpu_custom_call.1} parent=5 // pred_check
        %p205 = pneg %p204
      $region26: #{tpu_custom_call.1} parent=5 // pred_check_branch
        %207 = sbr.rel (%p205) target = $region28
      $region27: #{tpu_custom_call.1} parent=5 // pred_region
        // Predicated region
        $region29: #{tpu_custom_call.1} parent=27 // pred_check
          %p208 = pneg %p57
        $region30: #{tpu_custom_call.1} parent=27 // pred_check_branch
          %210 = sbr.rel (%p208) target = $region32
        $region31: #{tpu_custom_call.1} parent=27 // pred_region
          %s211 = sand.u32 %s47, 1
          %s212 = scalar_lea.sflag [#allocation6], %s211
          %s213 = sand.u32 %s47, 1
          %s214 = smul.addr %s213, 512
          %s215 = scalar_lea.vmem [#allocation5], %s214
          %s216 = smul.u32 32, %s30
          %s217 = smul.u32 4, %s31
          %s219 = ssub.s32 8192, 8192
          %220 = vsyncadd %s212, %s219
          %s221 = smul.addr %s216, 8
          %s222 = sadd.s32 %s217, %s221
          %s223 = smul.addr %s222, 64
          %s224 = scalar_lea.hbm %s1, %s223
          %s225 = sshll.u32 %s215, 4
          %s226 = int_to_ptr.vmem [resolvable:$true] %s225
          %231 = dma.hbm_to_vmem [thread:$0]  %s224, 8192, %s226, %s212, 512, 256, 16
        $region32: #{tpu_custom_call.1} parent=27 // pred_fallthru
          _
      $region28: #{tpu_custom_call.1} parent=5 // pred_fallthru
        _
      %p232 = scmp.le.s32.totalorder 1, %s23
      %p233 = scmp.lt.s32.totalorder %s23, 9
      %p234 = pnand %p232, %p233
      %p235 = pneg %p234
      // Predicated region
      $region33: #{tpu_custom_call.1} parent=5 // pred_check
        _
      $region34: #{tpu_custom_call.1} parent=5 // pred_check_branch
        %237 = sbr.rel (%p234) target = $region36
      $region35: #{tpu_custom_call.1} parent=5 // pred_region
        %s238 = ssub.s32 %s23, 1
        %s239 = sand.u32 %s50, 1
        %s240 = scalar_lea.sflag [#allocation6], %s239
        %s241 = sand.u32 %s50, 1
        %s242 = smul.addr %s241, 512
        %s243 = scalar_lea.vmem [#allocation5], %s242
        // Predicated region
        $region37: #{tpu_custom_call.1} parent=35 // pred_check
          %p244 = pneg %p63
        $region38: #{tpu_custom_call.1} parent=35 // pred_check_branch
          %246 = sbr.rel (%p244) target = $region40
        $region39: #{tpu_custom_call.1} parent=35 // pred_region
          %247 = dma.done %s240, 8192
        $region40: #{tpu_custom_call.1} parent=35 // pred_fallthru
          _
        // Predicated region
        $region41: #{tpu_custom_call.1} parent=35 // pred_check
          %p248 = pneg %p84
        $region42: #{tpu_custom_call.1} parent=35 // pred_check_branch
          %250 = sbr.rel (%p248) target = $region44
        $region43: #{tpu_custom_call.1} parent=35 // pred_region
          %251 = dma.done [#allocation9], 8192
        $region44: #{tpu_custom_call.1} parent=35 // pred_fallthru
          _
        // Predicated region
        $region45: #{tpu_custom_call.1} parent=35 // pred_check
          %p252 = pneg %p105
        $region46: #{tpu_custom_call.1} parent=35 // pred_check_branch
          %254 = sbr.rel (%p252) target = $region48
        $region47: #{tpu_custom_call.1} parent=35 // pred_region
          %255 = dma.done [#allocation9], 16
        $region48: #{tpu_custom_call.1} parent=35 // pred_fallthru
          _
        // Predicated region
        $region49: #{tpu_custom_call.1} parent=35 // pred_check
          %p256 = pneg %p126
        $region50: #{tpu_custom_call.1} parent=35 // pred_check_branch
          %258 = sbr.rel (%p256) target = $region52
        $region51: #{tpu_custom_call.1} parent=35 // pred_region
          %259 = dma.done [#allocation12], 1024
        $region52: #{tpu_custom_call.1} parent=35 // pred_fallthru
          _
        %s260 = sand.u32 %s50, 1
        %s261 = scalar_lea.sflag [#allocation6], %s260
        %s262 = sand.u32 %s50, 1
        %s263 = smul.addr %s262, 512
        %s264 = scalar_lea.vmem [#allocation5], %s263
        %p265 = pneg %p63
        %p266 = pneg %p60
        %p267 = pneg %p84
        %p268 = pneg %p81
        %p269 = pneg %p105
        %p270 = pneg %p102
        %p271 = pneg %p126
        %p272 = pneg %p123
        %p273 = pneg %p152
        %p274 = pneg %p149
        %s275 = sand.u32 %s139, 1
        %s276 = scalar_lea.sflag [#allocation7], %s275
        %s277 = sand.u32 %s139, 1
        %s278 = smul.addr %s277, 128
        %s279 = scalar_lea.vmem [#allocation13], %s278
        %s280 = smul.u32 32, %s32
        %s281 = smul.u32 4, %s33
        %s282 = smul.u32 32, %s32
        %p284 = scmp.eq.s32.totalorder %s33, 0
        // Predicated region
        $region53: #{tpu_custom_call.1} parent=35 // pred_check
          %p285 = pneg %p284
        $region54: #{tpu_custom_call.1} parent=35 // pred_check_branch
          %287 = sbr.rel (%p285) target = $region56
        $region55: #{tpu_custom_call.1} parent=35 // pred_region
          %288 = vst [vmem:[#allocation2] sm:$0xff] 0.0
          %289 = vst [vmem:[#allocation2 + $0x8] sm:$0xff] 0.0
          %290 = vst [vmem:[#allocation2 + $0x10] sm:$0xff] 0.0
          %291 = vst [vmem:[#allocation2 + $0x18] sm:$0xff] 0.0
          %292 = vst [vmem:[#allocation2 + $0x20] sm:$0xff] 0.0
          %293 = vst [vmem:[#allocation2 + $0x28] sm:$0xff] 0.0
          %294 = vst [vmem:[#allocation2 + $0x30] sm:$0xff] 0.0
          %295 = vst [vmem:[#allocation2 + $0x38] sm:$0xff] 0.0
          %296 = vst [vmem:[#allocation2 + $0x40] sm:$0xff] 0.0
          %297 = vst [vmem:[#allocation2 + $0x48] sm:$0xff] 0.0
          %298 = vst [vmem:[#allocation2 + $0x50] sm:$0xff] 0.0
          %299 = vst [vmem:[#allocation2 + $0x58] sm:$0xff] 0.0
          %300 = vst [vmem:[#allocation2 + $0x60] sm:$0xff] 0.0
          %301 = vst [vmem:[#allocation2 + $0x68] sm:$0xff] 0.0
          %302 = vst [vmem:[#allocation2 + $0x70] sm:$0xff] 0.0
          %303 = vst [vmem:[#allocation2 + $0x78] sm:$0xff] 0.0
          %304 = vst [vmem:[#allocation2 + $0x80] sm:$0xff] 0.0
          %305 = vst [vmem:[#allocation2 + $0x88] sm:$0xff] 0.0
          %306 = vst [vmem:[#allocation2 + $0x90] sm:$0xff] 0.0
          %307 = vst [vmem:[#allocation2 + $0x98] sm:$0xff] 0.0
          %308 = vst [vmem:[#allocation2 + $0xa0] sm:$0xff] 0.0
          %309 = vst [vmem:[#allocation2 + $0xa8] sm:$0xff] 0.0
          %310 = vst [vmem:[#allocation2 + $0xb0] sm:$0xff] 0.0
          %311 = vst [vmem:[#allocation2 + $0xb8] sm:$0xff] 0.0
          %312 = vst [vmem:[#allocation2 + $0xc0] sm:$0xff] 0.0
          %313 = vst [vmem:[#allocation2 + $0xc8] sm:$0xff] 0.0
          %314 = vst [vmem:[#allocation2 + $0xd0] sm:$0xff] 0.0
          %315 = vst [vmem:[#allocation2 + $0xd8] sm:$0xff] 0.0
          %316 = vst [vmem:[#allocation2 + $0xe0] sm:$0xff] 0.0
          %317 = vst [vmem:[#allocation2 + $0xe8] sm:$0xff] 0.0
          %318 = vst [vmem:[#allocation2 + $0xf0] sm:$0xff] 0.0
          %319 = vst [vmem:[#allocation2 + $0xf8] sm:$0xff] 0.0
        $region56: #{tpu_custom_call.1} parent=35 // pred_fallthru
          _
        %s320 = smul.u32 %s32, 2
        %s321 = sadd.s32 %s320, %s33
        %s322 = sld [smem:[#allocation4 + %s321]]
        %p323 = scmp.ne.s32.totalorder %s322, 0
        // Predicated region
        $region57: #{tpu_custom_call.1} parent=35 // pred_check
          %p324 = pneg %p323
        $region58: #{tpu_custom_call.1} parent=35 // pred_check_branch
          %326 = sbr.rel (%p324) target = $region60
        $region59: #{tpu_custom_call.1} parent=35 // pred_region
          %s327 = smul.u32 %s33, 512
          %s328 = sshra.s32 %s327, 3
          %s329 = sand.u32 %s327, 7
          %s330 = smul.addr %s328, 4
          %s331 = scalar_lea.vmem [#allocation8], %s330
          %v332 = vld [vmem:[%s331] sm:$0xf]
          %v333 = vld [vmem:[%s331 + $0x4] sm:$0xf]
          %v334 = vld [vmem:[%s331 + $0x8] sm:$0xf]
          %v335 = vld [vmem:[%s331 + $0xc] sm:$0xf]
          %v336 = vld [vmem:[%s331 + $0x10] sm:$0xf]
          %v337 = vld [vmem:[%s331 + $0x14] sm:$0xf]
          %v338 = vld [vmem:[%s331 + $0x18] sm:$0xf]
          %v339 = vld [vmem:[%s331 + $0x1c] sm:$0xf]
          %v340 = vld [vmem:[%s331 + $0x20] sm:$0xf]
          %v341 = vld [vmem:[%s331 + $0x24] sm:$0xf]
          %v342 = vld [vmem:[%s331 + $0x28] sm:$0xf]
          %v343 = vld [vmem:[%s331 + $0x2c] sm:$0xf]
          %v344 = vld [vmem:[%s331 + $0x30] sm:$0xf]
          %v345 = vld [vmem:[%s331 + $0x34] sm:$0xf]
          %v346 = vld [vmem:[%s331 + $0x38] sm:$0xf]
          %v347 = vld [vmem:[%s331 + $0x3c] sm:$0xf]
          %v348 = vld [vmem:[%s331 + $0x40] sm:$0xf]
          %v349 = vld [vmem:[%s331 + $0x44] sm:$0xf]
          %v350 = vld [vmem:[%s331 + $0x48] sm:$0xf]
          %v351 = vld [vmem:[%s331 + $0x4c] sm:$0xf]
          %v352 = vld [vmem:[%s331 + $0x50] sm:$0xf]
          %v353 = vld [vmem:[%s331 + $0x54] sm:$0xf]
          %v354 = vld [vmem:[%s331 + $0x58] sm:$0xf]
          %v355 = vld [vmem:[%s331 + $0x5c] sm:$0xf]
          %v356 = vld [vmem:[%s331 + $0x60] sm:$0xf]
          %v357 = vld [vmem:[%s331 + $0x64] sm:$0xf]
          %v358 = vld [vmem:[%s331 + $0x68] sm:$0xf]
          %v359 = vld [vmem:[%s331 + $0x6c] sm:$0xf]
          %v360 = vld [vmem:[%s331 + $0x70] sm:$0xf]
          %v361 = vld [vmem:[%s331 + $0x74] sm:$0xf]
          %v362 = vld [vmem:[%s331 + $0x78] sm:$0xf]
          %v363 = vld [vmem:[%s331 + $0x7c] sm:$0xf]
          %v364 = vld [vmem:[%s331 + $0x80] sm:$0xf]
          %v365 = vld [vmem:[%s331 + $0x84] sm:$0xf]
          %v366 = vld [vmem:[%s331 + $0x88] sm:$0xf]
          %v367 = vld [vmem:[%s331 + $0x8c] sm:$0xf]
          %v368 = vld [vmem:[%s331 + $0x90] sm:$0xf]
          %v369 = vld [vmem:[%s331 + $0x94] sm:$0xf]
          %v370 = vld [vmem:[%s331 + $0x98] sm:$0xf]
          %v371 = vld [vmem:[%s331 + $0x9c] sm:$0xf]
          %v372 = vld [vmem:[%s331 + $0xa0] sm:$0xf]
          %v373 = vld [vmem:[%s331 + $0xa4] sm:$0xf]
          %v374 = vld [vmem:[%s331 + $0xa8] sm:$0xf]
          %v375 = vld [vmem:[%s331 + $0xac] sm:$0xf]
          %v376 = vld [vmem:[%s331 + $0xb0] sm:$0xf]
          %v377 = vld [vmem:[%s331 + $0xb4] sm:$0xf]
          %v378 = vld [vmem:[%s331 + $0xb8] sm:$0xf]
          %v379 = vld [vmem:[%s331 + $0xbc] sm:$0xf]
          %v380 = vld [vmem:[%s331 + $0xc0] sm:$0xf]
          %v381 = vld [vmem:[%s331 + $0xc4] sm:$0xf]
          %v382 = vld [vmem:[%s331 + $0xc8] sm:$0xf]
          %v383 = vld [vmem:[%s331 + $0xcc] sm:$0xf]
          %v384 = vld [vmem:[%s331 + $0xd0] sm:$0xf]
          %v385 = vld [vmem:[%s331 + $0xd4] sm:$0xf]
          %v386 = vld [vmem:[%s331 + $0xd8] sm:$0xf]
          %v387 = vld [vmem:[%s331 + $0xdc] sm:$0xf]
          %v388 = vld [vmem:[%s331 + $0xe0] sm:$0xf]
          %v389 = vld [vmem:[%s331 + $0xe4] sm:$0xf]
          %v390 = vld [vmem:[%s331 + $0xe8] sm:$0xf]
          %v391 = vld [vmem:[%s331 + $0xec] sm:$0xf]
          %v392 = vld [vmem:[%s331 + $0xf0] sm:$0xf]
          %v393 = vld [vmem:[%s331 + $0xf4] sm:$0xf]
          %v394 = vld [vmem:[%s331 + $0xf8] sm:$0xf]
          %v395 = vld [vmem:[%s331 + $0xfc] sm:$0xf]
          %v396 = vld [vmem:[#allocation2] sm:$0xff]
          %v397 = vld [vmem:[#allocation2 + $0x8] sm:$0xff]
          %v398 = vld [vmem:[#allocation2 + $0x10] sm:$0xff]
          %v399 = vld [vmem:[#allocation2 + $0x18] sm:$0xff]
          %v400 = vld [vmem:[#allocation2 + $0x20] sm:$0xff]
          %v401 = vld [vmem:[#allocation2 + $0x28] sm:$0xff]
          %v402 = vld [vmem:[#allocation2 + $0x30] sm:$0xff]
          %v403 = vld [vmem:[#allocation2 + $0x38] sm:$0xff]
          %v404 = vld [vmem:[#allocation2 + $0x40] sm:$0xff]
          %v405 = vld [vmem:[#allocation2 + $0x48] sm:$0xff]
          %v406 = vld [vmem:[#allocation2 + $0x50] sm:$0xff]
          %v407 = vld [vmem:[#allocation2 + $0x58] sm:$0xff]
          %v408 = vld [vmem:[#allocation2 + $0x60] sm:$0xff]
          %v409 = vld [vmem:[#allocation2 + $0x68] sm:$0xff]
          %v410 = vld [vmem:[#allocation2 + $0x70] sm:$0xff]
          %v411 = vld [vmem:[#allocation2 + $0x78] sm:$0xff]
          %v412 = vld [vmem:[#allocation2 + $0x80] sm:$0xff]
          %v413 = vld [vmem:[#allocation2 + $0x88] sm:$0xff]
          %v414 = vld [vmem:[#allocation2 + $0x90] sm:$0xff]
          %v415 = vld [vmem:[#allocation2 + $0x98] sm:$0xff]
          %v416 = vld [vmem:[#allocation2 + $0xa0] sm:$0xff]
          %v417 = vld [vmem:[#allocation2 + $0xa8] sm:$0xff]
          %v418 = vld [vmem:[#allocation2 + $0xb0] sm:$0xff]
          %v419 = vld [vmem:[#allocation2 + $0xb8] sm:$0xff]
          %v420 = vld [vmem:[#allocation2 + $0xc0] sm:$0xff]
          %v421 = vld [vmem:[#allocation2 + $0xc8] sm:$0xff]
          %v422 = vld [vmem:[#allocation2 + $0xd0] sm:$0xff]
          %v423 = vld [vmem:[#allocation2 + $0xd8] sm:$0xff]
          %v424 = vld [vmem:[#allocation2 + $0xe0] sm:$0xff]
          %v425 = vld [vmem:[#allocation2 + $0xe8] sm:$0xff]
          %v426 = vld [vmem:[#allocation2 + $0xf0] sm:$0xff]
          %v427 = vld [vmem:[#allocation2 + $0xf8] sm:$0xff]
          %v428 = vld [vmem:[%s243] sm:$0xff]
          %v429 = vld [vmem:[%s243 + $0x8] sm:$0xff]
          %v430 = vld [vmem:[%s243 + $0x10] sm:$0xff]
          %v431 = vld [vmem:[%s243 + $0x18] sm:$0xff]
          %v432 = vld [vmem:[%s243 + $0x20] sm:$0xff]
          %v433 = vld [vmem:[%s243 + $0x28] sm:$0xff]
          %v434 = vld [vmem:[%s243 + $0x30] sm:$0xff]
          %v435 = vld [vmem:[%s243 + $0x38] sm:$0xff]
          %v436 = vld [vmem:[%s243 + $0x40] sm:$0xff]
          %v437 = vld [vmem:[%s243 + $0x48] sm:$0xff]
          %v438 = vld [vmem:[%s243 + $0x50] sm:$0xff]
          %v439 = vld [vmem:[%s243 + $0x58] sm:$0xff]
          %v440 = vld [vmem:[%s243 + $0x60] sm:$0xff]
          %v441 = vld [vmem:[%s243 + $0x68] sm:$0xff]
          %v442 = vld [vmem:[%s243 + $0x70] sm:$0xff]
          %v443 = vld [vmem:[%s243 + $0x78] sm:$0xff]
          %v444 = vld [vmem:[%s243 + $0x80] sm:$0xff]
          %v445 = vld [vmem:[%s243 + $0x88] sm:$0xff]
          %v446 = vld [vmem:[%s243 + $0x90] sm:$0xff]
          %v447 = vld [vmem:[%s243 + $0x98] sm:$0xff]
          %v448 = vld [vmem:[%s243 + $0xa0] sm:$0xff]
          %v449 = vld [vmem:[%s243 + $0xa8] sm:$0xff]
          %v450 = vld [vmem:[%s243 + $0xb0] sm:$0xff]
          %v451 = vld [vmem:[%s243 + $0xb8] sm:$0xff]
          %v452 = vld [vmem:[%s243 + $0xc0] sm:$0xff]
          %v453 = vld [vmem:[%s243 + $0xc8] sm:$0xff]
          %v454 = vld [vmem:[%s243 + $0xd0] sm:$0xff]
          %v455 = vld [vmem:[%s243 + $0xd8] sm:$0xff]
          %v456 = vld [vmem:[%s243 + $0xe0] sm:$0xff]
          %v457 = vld [vmem:[%s243 + $0xe8] sm:$0xff]
          %v458 = vld [vmem:[%s243 + $0xf0] sm:$0xff]
          %v459 = vld [vmem:[%s243 + $0xf8] sm:$0xff]
          %v460 = vld [vmem:[%s243 + $0x100] sm:$0xff]
          %v461 = vld [vmem:[%s243 + $0x108] sm:$0xff]
          %v462 = vld [vmem:[%s243 + $0x110] sm:$0xff]
          %v463 = vld [vmem:[%s243 + $0x118] sm:$0xff]
          %v464 = vld [vmem:[%s243 + $0x120] sm:$0xff]
          %v465 = vld [vmem:[%s243 + $0x128] sm:$0xff]
          %v466 = vld [vmem:[%s243 + $0x130] sm:$0xff]
          %v467 = vld [vmem:[%s243 + $0x138] sm:$0xff]
          %v468 = vld [vmem:[%s243 + $0x140] sm:$0xff]
          %v469 = vld [vmem:[%s243 + $0x148] sm:$0xff]
          %v470 = vld [vmem:[%s243 + $0x150] sm:$0xff]
          %v471 = vld [vmem:[%s243 + $0x158] sm:$0xff]
          %v472 = vld [vmem:[%s243 + $0x160] sm:$0xff]
          %v473 = vld [vmem:[%s243 + $0x168] sm:$0xff]
          %v474 = vld [vmem:[%s243 + $0x170] sm:$0xff]
          %v475 = vld [vmem:[%s243 + $0x178] sm:$0xff]
          %v476 = vld [vmem:[%s243 + $0x180] sm:$0xff]
          %v477 = vld [vmem:[%s243 + $0x188] sm:$0xff]
          %v478 = vld [vmem:[%s243 + $0x190] sm:$0xff]
          %v479 = vld [vmem:[%s243 + $0x198] sm:$0xff]
          %v480 = vld [vmem:[%s243 + $0x1a0] sm:$0xff]
          %v481 = vld [vmem:[%s243 + $0x1a8] sm:$0xff]
          %v482 = vld [vmem:[%s243 + $0x1b0] sm:$0xff]
          %v483 = vld [vmem:[%s243 + $0x1b8] sm:$0xff]
          %v484 = vld [vmem:[%s243 + $0x1c0] sm:$0xff]
          %v485 = vld [vmem:[%s243 + $0x1c8] sm:$0xff]
          %v486 = vld [vmem:[%s243 + $0x1d0] sm:$0xff]
          %v487 = vld [vmem:[%s243 + $0x1d8] sm:$0xff]
          %v488 = vld [vmem:[%s243 + $0x1e0] sm:$0xff]
          %v489 = vld [vmem:[%s243 + $0x1e8] sm:$0xff]
          %v490 = vld [vmem:[%s243 + $0x1f0] sm:$0xff]
          %v491 = vld [vmem:[%s243 + $0x1f8] sm:$0xff]
          %v556 = vunpack.c.l.b16 %v428
          %v557 = vunpack.c.h.b16 %v428
          %v558 = vunpack.c.l.b16 %v429
          %v559 = vunpack.c.h.b16 %v429
          %v560 = vunpack.c.l.b16 %v430
          %v561 = vunpack.c.h.b16 %v430
          %v562 = vunpack.c.l.b16 %v431
          %v563 = vunpack.c.h.b16 %v431
          %v564 = vunpack.c.l.b16 %v432
          %v565 = vunpack.c.h.b16 %v432
          %v566 = vunpack.c.l.b16 %v433
          %v567 = vunpack.c.h.b16 %v433
          %v568 = vunpack.c.l.b16 %v434
          %v569 = vunpack.c.h.b16 %v434
          %v570 = vunpack.c.l.b16 %v435
          %v571 = vunpack.c.h.b16 %v435
          %v572 = vunpack.c.l.b16 %v436
          %v573 = vunpack.c.h.b16 %v436
          %v574 = vunpack.c.l.b16 %v437
          %v575 = vunpack.c.h.b16 %v437
          %v576 = vunpack.c.l.b16 %v438
          %v577 = vunpack.c.h.b16 %v438
          %v578 = vunpack.c.l.b16 %v439
          %v579 = vunpack.c.h.b16 %v439
          %v580 = vunpack.c.l.b16 %v440
          %v581 = vunpack.c.h.b16 %v440
          %v582 = vunpack.c.l.b16 %v441
          %v583 = vunpack.c.h.b16 %v441
          %v584 = vunpack.c.l.b16 %v442
          %v585 = vunpack.c.h.b16 %v442
          %v586 = vunpack.c.l.b16 %v443
          %v587 = vunpack.c.h.b16 %v443
          %v588 = vunpack.c.l.b16 %v444
          %v589 = vunpack.c.h.b16 %v444
          %v590 = vunpack.c.l.b16 %v445
          %v591 = vunpack.c.h.b16 %v445
          %v592 = vunpack.c.l.b16 %v446
          %v593 = vunpack.c.h.b16 %v446
          %v594 = vunpack.c.l.b16 %v447
          %v595 = vunpack.c.h.b16 %v447
          %v596 = vunpack.c.l.b16 %v448
          %v597 = vunpack.c.h.b16 %v448
          %v598 = vunpack.c.l.b16 %v449
          %v599 = vunpack.c.h.b16 %v449
          %v600 = vunpack.c.l.b16 %v450
          %v601 = vunpack.c.h.b16 %v450
          %v602 = vunpack.c.l.b16 %v451
          %v603 = vunpack.c.h.b16 %v451
          %v604 = vunpack.c.l.b16 %v452
          %v605 = vunpack.c.h.b16 %v452
          %v606 = vunpack.c.l.b16 %v453
          %v607 = vunpack.c.h.b16 %v453
          %v608 = vunpack.c.l.b16 %v454
          %v609 = vunpack.c.h.b16 %v454
          %v610 = vunpack.c.l.b16 %v455
          %v611 = vunpack.c.h.b16 %v455
          %v612 = vunpack.c.l.b16 %v456
          %v613 = vunpack.c.h.b16 %v456
          %v614 = vunpack.c.l.b16 %v457
          %v615 = vunpack.c.h.b16 %v457
          %v616 = vunpack.c.l.b16 %v458
          %v617 = vunpack.c.h.b16 %v458
          %v618 = vunpack.c.l.b16 %v459
          %v619 = vunpack.c.h.b16 %v459
          %v620 = vunpack.c.l.b16 %v460
          %v621 = vunpack.c.h.b16 %v460
          %v622 = vunpack.c.l.b16 %v461
          %v623 = vunpack.c.h.b16 %v461
          %v624 = vunpack.c.l.b16 %v462
          %v625 = vunpack.c.h.b16 %v462
          %v626 = vunpack.c.l.b16 %v463
          %v627 = vunpack.c.h.b16 %v463
          %v628 = vunpack.c.l.b16 %v464
          %v629 = vunpack.c.h.b16 %v464
          %v630 = vunpack.c.l.b16 %v465
          %v631 = vunpack.c.h.b16 %v465
          %v632 = vunpack.c.l.b16 %v466
          %v633 = vunpack.c.h.b16 %v466
          %v634 = vunpack.c.l.b16 %v467
          %v635 = vunpack.c.h.b16 %v467
          %v636 = vunpack.c.l.b16 %v468
          %v637 = vunpack.c.h.b16 %v468
          %v638 = vunpack.c.l.b16 %v469
          %v639 = vunpack.c.h.b16 %v469
          %v640 = vunpack.c.l.b16 %v470
          %v641 = vunpack.c.h.b16 %v470
          %v642 = vunpack.c.l.b16 %v471
          %v643 = vunpack.c.h.b16 %v471
          %v644 = vunpack.c.l.b16 %v472
          %v645 = vunpack.c.h.b16 %v472
          %v646 = vunpack.c.l.b16 %v473
          %v647 = vunpack.c.h.b16 %v473
          %v648 = vunpack.c.l.b16 %v474
          %v649 = vunpack.c.h.b16 %v474
          %v650 = vunpack.c.l.b16 %v475
          %v651 = vunpack.c.h.b16 %v475
          %v652 = vunpack.c.l.b16 %v476
          %v653 = vunpack.c.h.b16 %v476
          %v654 = vunpack.c.l.b16 %v477
          %v655 = vunpack.c.h.b16 %v477
          %v656 = vunpack.c.l.b16 %v478
          %v657 = vunpack.c.h.b16 %v478
          %v658 = vunpack.c.l.b16 %v479
          %v659 = vunpack.c.h.b16 %v479
          %v660 = vunpack.c.l.b16 %v480
          %v661 = vunpack.c.h.b16 %v480
          %v662 = vunpack.c.l.b16 %v481
          %v663 = vunpack.c.h.b16 %v481
          %v664 = vunpack.c.l.b16 %v482
          %v665 = vunpack.c.h.b16 %v482
          %v666 = vunpack.c.l.b16 %v483
          %v667 = vunpack.c.h.b16 %v483
          %v668 = vunpack.c.l.b16 %v484
          %v669 = vunpack.c.h.b16 %v484
          %v670 = vunpack.c.l.b16 %v485
          %v671 = vunpack.c.h.b16 %v485
          %v672 = vunpack.c.l.b16 %v486
          %v673 = vunpack.c.h.b16 %v486
          %v674 = vunpack.c.l.b16 %v487
          %v675 = vunpack.c.h.b16 %v487
          %v676 = vunpack.c.l.b16 %v488
          %v677 = vunpack.c.h.b16 %v488
          %v678 = vunpack.c.l.b16 %v489
          %v679 = vunpack.c.h.b16 %v489
          %v680 = vunpack.c.l.b16 %v490
          %v681 = vunpack.c.h.b16 %v490
          %v682 = vunpack.c.l.b16 %v491
          %v683 = vunpack.c.h.b16 %v491
          %v684 = vpack.c.b16 %v560, %v556
          %v685 = vpack.c.b16 %v561, %v557
          %v686 = vpack.c.b16 %v562, %v558
          %v687 = vpack.c.b16 %v563, %v559
          %v688 = vpack.c.b16 %v568, %v564
          %v689 = vpack.c.b16 %v569, %v565
          %v690 = vpack.c.b16 %v570, %v566
          %v691 = vpack.c.b16 %v571, %v567
          %v692 = vpack.c.b16 %v576, %v572
          %v693 = vpack.c.b16 %v577, %v573
          %v694 = vpack.c.b16 %v578, %v574
          %v695 = vpack.c.b16 %v579, %v575
          %v696 = vpack.c.b16 %v584, %v580
          %v697 = vpack.c.b16 %v585, %v581
          %v698 = vpack.c.b16 %v586, %v582
          %v699 = vpack.c.b16 %v587, %v583
          %v700 = vpack.c.b16 %v592, %v588
          %v701 = vpack.c.b16 %v593, %v589
          %v702 = vpack.c.b16 %v594, %v590
          %v703 = vpack.c.b16 %v595, %v591
          %v704 = vpack.c.b16 %v600, %v596
          %v705 = vpack.c.b16 %v601, %v597
          %v706 = vpack.c.b16 %v602, %v598
          %v707 = vpack.c.b16 %v603, %v599
          %v708 = vpack.c.b16 %v608, %v604
          %v709 = vpack.c.b16 %v609, %v605
          %v710 = vpack.c.b16 %v610, %v606
          %v711 = vpack.c.b16 %v611, %v607
          %v712 = vpack.c.b16 %v616, %v612
          %v713 = vpack.c.b16 %v617, %v613
          %v714 = vpack.c.b16 %v618, %v614
          %v715 = vpack.c.b16 %v619, %v615
          %v716 = vpack.c.b16 %v624, %v620
          %v717 = vpack.c.b16 %v625, %v621
          %v718 = vpack.c.b16 %v626, %v622
          %v719 = vpack.c.b16 %v627, %v623
          %v720 = vpack.c.b16 %v632, %v628
          %v721 = vpack.c.b16 %v633, %v629
          %v722 = vpack.c.b16 %v634, %v630
          %v723 = vpack.c.b16 %v635, %v631
          %v724 = vpack.c.b16 %v640, %v636
          %v725 = vpack.c.b16 %v641, %v637
          %v726 = vpack.c.b16 %v642, %v638
          %v727 = vpack.c.b16 %v643, %v639
          %v728 = vpack.c.b16 %v648, %v644
          %v729 = vpack.c.b16 %v649, %v645
          %v730 = vpack.c.b16 %v650, %v646
          %v731 = vpack.c.b16 %v651, %v647
          %v732 = vpack.c.b16 %v656, %v652
          %v733 = vpack.c.b16 %v657, %v653
          %v734 = vpack.c.b16 %v658, %v654
          %v735 = vpack.c.b16 %v659, %v655
          %v736 = vpack.c.b16 %v664, %v660
          %v737 = vpack.c.b16 %v665, %v661
          %v738 = vpack.c.b16 %v666, %v662
          %v739 = vpack.c.b16 %v667, %v663
          %v740 = vpack.c.b16 %v672, %v668
          %v741 = vpack.c.b16 %v673, %v669
          %v742 = vpack.c.b16 %v674, %v670
          %v743 = vpack.c.b16 %v675, %v671
          %v744 = vpack.c.b16 %v680, %v676
          %v745 = vpack.c.b16 %v681, %v677
          %v746 = vpack.c.b16 %v682, %v678
          %v747 = vpack.c.b16 %v683, %v679
          %v876 = vunpack.c.l.b16 %v332
          %v877 = vunpack.c.l.b16 %v333
          %v878 = vunpack.c.l.b16 %v334
          %v879 = vunpack.c.l.b16 %v335
          %v880 = vunpack.c.l.b16 %v336
          %v881 = vunpack.c.l.b16 %v337
          %v882 = vunpack.c.l.b16 %v338
          %v883 = vunpack.c.l.b16 %v339
          %v884 = vunpack.c.l.b16 %v340
          %v885 = vunpack.c.l.b16 %v341
          %v886 = vunpack.c.l.b16 %v342
          %v887 = vunpack.c.l.b16 %v343
          %v888 = vunpack.c.l.b16 %v344
          %v889 = vunpack.c.l.b16 %v345
          %v890 = vunpack.c.l.b16 %v346
          %v891 = vunpack.c.l.b16 %v347
          %v892 = vunpack.c.l.b16 %v348
          %v893 = vunpack.c.l.b16 %v349
          %v894 = vunpack.c.l.b16 %v350
          %v895 = vunpack.c.l.b16 %v351
          %v896 = vunpack.c.l.b16 %v352
          %v897 = vunpack.c.l.b16 %v353
          %v898 = vunpack.c.l.b16 %v354
          %v899 = vunpack.c.l.b16 %v355
          %v900 = vunpack.c.l.b16 %v356
          %v901 = vunpack.c.l.b16 %v357
          %v902 = vunpack.c.l.b16 %v358
          %v903 = vunpack.c.l.b16 %v359
          %v904 = vunpack.c.l.b16 %v360
          %v905 = vunpack.c.l.b16 %v361
          %v906 = vunpack.c.l.b16 %v362
          %v907 = vunpack.c.l.b16 %v363
          %v908 = vunpack.c.l.b16 %v364
          %v909 = vunpack.c.l.b16 %v365
          %v910 = vunpack.c.l.b16 %v366
          %v911 = vunpack.c.l.b16 %v367
          %v912 = vunpack.c.l.b16 %v368
          %v913 = vunpack.c.l.b16 %v369
          %v914 = vunpack.c.l.b16 %v370
          %v915 = vunpack.c.l.b16 %v371
          %v916 = vunpack.c.l.b16 %v372
          %v917 = vunpack.c.l.b16 %v373
          %v918 = vunpack.c.l.b16 %v374
          %v919 = vunpack.c.l.b16 %v375
          %v920 = vunpack.c.l.b16 %v376
          %v921 = vunpack.c.l.b16 %v377
          %v922 = vunpack.c.l.b16 %v378
          %v923 = vunpack.c.l.b16 %v379
          %v924 = vunpack.c.l.b16 %v380
          %v925 = vunpack.c.l.b16 %v381
          %v926 = vunpack.c.l.b16 %v382
          %v927 = vunpack.c.l.b16 %v383
          %v928 = vunpack.c.l.b16 %v384
          %v929 = vunpack.c.l.b16 %v385
          %v930 = vunpack.c.l.b16 %v386
          %v931 = vunpack.c.l.b16 %v387
          %v932 = vunpack.c.l.b16 %v388
          %v933 = vunpack.c.l.b16 %v389
          %v934 = vunpack.c.l.b16 %v390
          %v935 = vunpack.c.l.b16 %v391
          %v936 = vunpack.c.l.b16 %v392
          %v937 = vunpack.c.l.b16 %v393
          %v938 = vunpack.c.l.b16 %v394
          %v939 = vunpack.c.l.b16 %v395
          %v940 = vpack.c.b16 %v877, %v876
          %v941 = vpack.c.b16 %v879, %v878
          %v942 = vpack.c.b16 %v881, %v880
          %v943 = vpack.c.b16 %v883, %v882
          %v944 = vpack.c.b16 %v885, %v884
          %v945 = vpack.c.b16 %v887, %v886
          %v946 = vpack.c.b16 %v889, %v888
          %v947 = vpack.c.b16 %v891, %v890
          %v948 = vpack.c.b16 %v893, %v892
          %v949 = vpack.c.b16 %v895, %v894
          %v950 = vpack.c.b16 %v897, %v896
          %v951 = vpack.c.b16 %v899, %v898
          %v952 = vpack.c.b16 %v901, %v900
          %v953 = vpack.c.b16 %v903, %v902
          %v954 = vpack.c.b16 %v905, %v904
          %v955 = vpack.c.b16 %v907, %v906
          %v956 = vpack.c.b16 %v909, %v908
          %v957 = vpack.c.b16 %v911, %v910
          %v958 = vpack.c.b16 %v913, %v912
          %v959 = vpack.c.b16 %v915, %v914
          %v960 = vpack.c.b16 %v917, %v916
          %v961 = vpack.c.b16 %v919, %v918
          %v962 = vpack.c.b16 %v921, %v920
          %v963 = vpack.c.b16 %v923, %v922
          %v964 = vpack.c.b16 %v925, %v924
          %v965 = vpack.c.b16 %v927, %v926
          %v966 = vpack.c.b16 %v929, %v928
          %v967 = vpack.c.b16 %v931, %v930
          %v968 = vpack.c.b16 %v933, %v932
          %v969 = vpack.c.b16 %v935, %v934
          %v970 = vpack.c.b16 %v937, %v936
          %v971 = vpack.c.b16 %v939, %v938
          %1004 = vmatprep.subr.bf16.mxu0 0
          %1005 = vmatpush1.bf16.msra.mxu0 %v947
          %1006 = vmatprep.subr.bf16.mxu0 0
          %1007 = vmatpush1.bf16.msra.mxu0 %v946
          %1008 = vmatprep.subr.bf16.mxu0 0
          %1009 = vmatpush1.bf16.msra.mxu0 %v945
          %1010 = vmatprep.subr.bf16.mxu0 0
          %1011 = vmatpush1.bf16.msra.mxu0 %v944
          %1012 = vmatprep.subr.bf16.mxu0 0
          %1013 = vmatpush1.bf16.msra.mxu0 %v943
          %1014 = vmatprep.subr.bf16.mxu0 0
          %1015 = vmatpush1.bf16.msra.mxu0 %v942
          %1016 = vmatprep.subr.bf16.mxu0 0
          %1017 = vmatpush1.bf16.msra.mxu0 %v941
          %1018 = vmatprep.subr.bf16.mxu0 0
          %1019 = vmatpush1.bf16.msra.mxu0 %v940
          %1020 = vmatprep.subr.bf16.mxu0 0
          %1021 = vmatpush2.bf16.msra.mxu0 %v955
          %1022 = vmatprep.subr.bf16.mxu0 0
          %1023 = vmatpush2.bf16.msra.mxu0 %v954
          %1024 = vmatprep.subr.bf16.mxu0 0
          %1025 = vmatpush2.bf16.msra.mxu0 %v953
          %1026 = vmatprep.subr.bf16.mxu0 0
          %1027 = vmatpush2.bf16.msra.mxu0 %v952
          %1028 = vmatprep.subr.bf16.mxu0 0
          %1029 = vmatpush2.bf16.msra.mxu0 %v951
          %1030 = vmatprep.subr.bf16.mxu0 0
          %1031 = vmatpush2.bf16.msra.mxu0 %v950
          %1032 = vmatprep.subr.bf16.mxu0 0
          %1033 = vmatpush2.bf16.msra.mxu0 %v949
          %1034 = vmatprep.subr.bf16.mxu0 0
          %1035 = vmatpush2.bf16.msra.mxu0 %v948
          %1036 = vmatprep.mubr.bf16.mxu0 %v685
          %1037 = vmatmul.mubr.bf16.gmra.mxu0 %v684
          %v1038 = vpop.f32.mrf.mxu0
          %v1039 = vadd.f32 0.0, %v1038
          %v1040 = vpop.f32.mrf.mxu0
          %v1041 = vpop.f32.mrf.mxu0
          %v1042 = vadd.f32 0.0, %v1041
          %v1043 = vpop.f32.mrf.mxu0
          %1044 = vmatprep.mubr.bf16.mxu0 %v689
          %1045 = vmatmul.mubr.bf16.gmra.mxu0 %v688
          %v1046 = vpop.f32.mrf.mxu0
          %v1047 = vadd.f32 0.0, %v1046
          %v1048 = vpop.f32.mrf.mxu0
          %v1049 = vpop.f32.mrf.mxu0
          %v1050 = vadd.f32 0.0, %v1049
          %v1051 = vpop.f32.mrf.mxu0
          %1052 = vmatprep.mubr.bf16.mxu0 %v693
          %1053 = vmatmul.mubr.bf16.gmra.mxu0 %v692
          %v1054 = vpop.f32.mrf.mxu0
          %v1055 = vadd.f32 0.0, %v1054
          %v1056 = vpop.f32.mrf.mxu0
          %v1057 = vpop.f32.mrf.mxu0
          %v1058 = vadd.f32 0.0, %v1057
          %v1059 = vpop.f32.mrf.mxu0
          %1060 = vmatprep.mubr.bf16.mxu0 %v697
          %1061 = vmatmul.mubr.bf16.gmra.mxu0 %v696
          %v1062 = vpop.f32.mrf.mxu0
          %v1063 = vadd.f32 0.0, %v1062
          %v1064 = vpop.f32.mrf.mxu0
          %v1065 = vpop.f32.mrf.mxu0
          %v1066 = vadd.f32 0.0, %v1065
          %v1067 = vpop.f32.mrf.mxu0
          %1068 = vmatprep.mubr.bf16.mxu0 %v701
          %1069 = vmatmul.mubr.bf16.gmra.mxu0 %v700
          %v1070 = vpop.f32.mrf.mxu0
          %v1071 = vadd.f32 0.0, %v1070
          %v1072 = vpop.f32.mrf.mxu0
          %v1073 = vpop.f32.mrf.mxu0
          %v1074 = vadd.f32 0.0, %v1073
          %v1075 = vpop.f32.mrf.mxu0
          %1076 = vmatprep.mubr.bf16.mxu0 %v705
          %1077 = vmatmul.mubr.bf16.gmra.mxu0 %v704
          %v1078 = vpop.f32.mrf.mxu0
          %v1079 = vadd.f32 0.0, %v1078
          %v1080 = vpop.f32.mrf.mxu0
          %v1081 = vpop.f32.mrf.mxu0
          %v1082 = vadd.f32 0.0, %v1081
          %v1083 = vpop.f32.mrf.mxu0
          %1084 = vmatprep.mubr.bf16.mxu0 %v709
          %1085 = vmatmul.mubr.bf16.gmra.mxu0 %v708
          %v1086 = vpop.f32.mrf.mxu0
          %v1087 = vadd.f32 0.0, %v1086
          %v1088 = vpop.f32.mrf.mxu0
          %v1089 = vpop.f32.mrf.mxu0
          %v1090 = vadd.f32 0.0, %v1089
          %v1091 = vpop.f32.mrf.mxu0
          %1092 = vmatprep.mubr.bf16.mxu0 %v713
          %1093 = vmatmul.mubr.bf16.gmra.mxu0 %v712
          %v1094 = vpop.f32.mrf.mxu0
          %v1095 = vadd.f32 0.0, %v1094
          %v1096 = vpop.f32.mrf.mxu0
          %v1097 = vpop.f32.mrf.mxu0
          %v1098 = vadd.f32 0.0, %v1097
          %v1099 = vpop.f32.mrf.mxu0
          %1100 = vmatprep.mubr.bf16.mxu0 %v717
          %1101 = vmatmul.mubr.bf16.gmra.mxu0 %v716
          %v1102 = vpop.f32.mrf.mxu0
          %v1103 = vadd.f32 0.0, %v1102
          %v1104 = vpop.f32.mrf.mxu0
          %v1105 = vpop.f32.mrf.mxu0
          %v1106 = vadd.f32 0.0, %v1105
          %v1107 = vpop.f32.mrf.mxu0
          %1108 = vmatprep.mubr.bf16.mxu0 %v721
          %1109 = vmatmul.mubr.bf16.gmra.mxu0 %v720
          %v1110 = vpop.f32.mrf.mxu0
          %v1111 = vadd.f32 0.0, %v1110
          %v1112 = vpop.f32.mrf.mxu0
          %v1113 = vpop.f32.mrf.mxu0
          %v1114 = vadd.f32 0.0, %v1113
          %v1115 = vpop.f32.mrf.mxu0
          %1116 = vmatprep.mubr.bf16.mxu0 %v725
          %1117 = vmatmul.mubr.bf16.gmra.mxu0 %v724
          %v1118 = vpop.f32.mrf.mxu0
          %v1119 = vadd.f32 0.0, %v1118
          %v1120 = vpop.f32.mrf.mxu0
          %v1121 = vpop.f32.mrf.mxu0
          %v1122 = vadd.f32 0.0, %v1121
          %v1123 = vpop.f32.mrf.mxu0
          %1124 = vmatprep.mubr.bf16.mxu0 %v729
          %1125 = vmatmul.mubr.bf16.gmra.mxu0 %v728
          %v1126 = vpop.f32.mrf.mxu0
          %v1127 = vadd.f32 0.0, %v1126
          %v1128 = vpop.f32.mrf.mxu0
          %v1129 = vpop.f32.mrf.mxu0
          %v1130 = vadd.f32 0.0, %v1129
          %v1131 = vpop.f32.mrf.mxu0
          %1132 = vmatprep.mubr.bf16.mxu0 %v733
          %1133 = vmatmul.mubr.bf16.gmra.mxu0 %v732
          %v1134 = vpop.f32.mrf.mxu0
          %v1135 = vadd.f32 0.0, %v1134
          %v1136 = vpop.f32.mrf.mxu0
          %v1137 = vpop.f32.mrf.mxu0
          %v1138 = vadd.f32 0.0, %v1137
          %v1139 = vpop.f32.mrf.mxu0
          %1140 = vmatprep.mubr.bf16.mxu0 %v737
          %1141 = vmatmul.mubr.bf16.gmra.mxu0 %v736
          %v1142 = vpop.f32.mrf.mxu0
          %v1143 = vadd.f32 0.0, %v1142
          %v1144 = vpop.f32.mrf.mxu0
          %v1145 = vpop.f32.mrf.mxu0
          %v1146 = vadd.f32 0.0, %v1145
          %v1147 = vpop.f32.mrf.mxu0
          %1148 = vmatprep.mubr.bf16.mxu0 %v741
          %1149 = vmatmul.mubr.bf16.gmra.mxu0 %v740
          %v1150 = vpop.f32.mrf.mxu0
          %v1151 = vadd.f32 0.0, %v1150
          %v1152 = vpop.f32.mrf.mxu0
          %v1153 = vpop.f32.mrf.mxu0
          %v1154 = vadd.f32 0.0, %v1153
          %v1155 = vpop.f32.mrf.mxu0
          %1156 = vmatprep.mubr.bf16.mxu0 %v745
          %1157 = vmatmul.mubr.bf16.gmra.mxu0 %v744
          %v1158 = vpop.f32.mrf.mxu0
          %v1159 = vadd.f32 0.0, %v1158
          %v1160 = vpop.f32.mrf.mxu0
          %v1161 = vpop.f32.mrf.mxu0
          %v1162 = vadd.f32 0.0, %v1161
          %v1163 = vpop.f32.mrf.mxu0
          %1164 = vdwg.mxu0
          %1165 = vmatprep.subr.bf16.mxu0 0
          %1166 = vmatpush1.bf16.msra.mxu0 %v963
          %1167 = vmatprep.subr.bf16.mxu0 0
          %1168 = vmatpush1.bf16.msra.mxu0 %v962
          %1169 = vmatprep.subr.bf16.mxu0 0
          %1170 = vmatpush1.bf16.msra.mxu0 %v961
          %1171 = vmatprep.subr.bf16.mxu0 0
          %1172 = vmatpush1.bf16.msra.mxu0 %v960
          %1173 = vmatprep.subr.bf16.mxu0 0
          %1174 = vmatpush1.bf16.msra.mxu0 %v959
          %1175 = vmatprep.subr.bf16.mxu0 0
          %1176 = vmatpush1.bf16.msra.mxu0 %v958
          %1177 = vmatprep.subr.bf16.mxu0 0
          %1178 = vmatpush1.bf16.msra.mxu0 %v957
          %1179 = vmatprep.subr.bf16.mxu0 0
          %1180 = vmatpush1.bf16.msra.mxu0 %v956
          %1181 = vmatprep.subr.bf16.mxu0 0
          %1182 = vmatpush2.bf16.msra.mxu0 %v971
          %1183 = vmatprep.subr.bf16.mxu0 0
          %1184 = vmatpush2.bf16.msra.mxu0 %v970
          %1185 = vmatprep.subr.bf16.mxu0 0
          %1186 = vmatpush2.bf16.msra.mxu0 %v969
          %1187 = vmatprep.subr.bf16.mxu0 0
          %1188 = vmatpush2.bf16.msra.mxu0 %v968
          %1189 = vmatprep.subr.bf16.mxu0 0
          %1190 = vmatpush2.bf16.msra.mxu0 %v967
          %1191 = vmatprep.subr.bf16.mxu0 0
          %1192 = vmatpush2.bf16.msra.mxu0 %v966
          %1193 = vmatprep.subr.bf16.mxu0 0
          %1194 = vmatpush2.bf16.msra.mxu0 %v965
          %1195 = vmatprep.subr.bf16.mxu0 0
          %1196 = vmatpush2.bf16.msra.mxu0 %v964
          %1197 = vmatprep.mubr.bf16.mxu0 %v687
          %1198 = vmatmul.mubr.bf16.gmra.mxu0 %v686
          %v1199 = vpop.f32.mrf.mxu0
          %v1200 = vadd.f32 %v1039, %v1199
          %v1201 = vpop.f32.mrf.mxu0
          %v1202 = vpop.f32.mrf.mxu0
          %v1203 = vadd.f32 %v1042, %v1202
          %v1204 = vpop.f32.mrf.mxu0
          %1205 = vmatprep.mubr.bf16.mxu0 %v691
          %1206 = vmatmul.mubr.bf16.gmra.mxu0 %v690
          %v1207 = vpop.f32.mrf.mxu0
          %v1208 = vadd.f32 %v1047, %v1207
          %v1209 = vpop.f32.mrf.mxu0
          %v1210 = vpop.f32.mrf.mxu0
          %v1211 = vadd.f32 %v1050, %v1210
          %v1212 = vpop.f32.mrf.mxu0
          %1213 = vmatprep.mubr.bf16.mxu0 %v695
          %1214 = vmatmul.mubr.bf16.gmra.mxu0 %v694
          %v1215 = vpop.f32.mrf.mxu0
          %v1216 = vadd.f32 %v1055, %v1215
          %v1217 = vpop.f32.mrf.mxu0
          %v1218 = vpop.f32.mrf.mxu0
          %v1219 = vadd.f32 %v1058, %v1218
          %v1220 = vpop.f32.mrf.mxu0
          %1221 = vmatprep.mubr.bf16.mxu0 %v699
          %1222 = vmatmul.mubr.bf16.gmra.mxu0 %v698
          %v1223 = vpop.f32.mrf.mxu0
          %v1224 = vadd.f32 %v1063, %v1223
          %v1225 = vpop.f32.mrf.mxu0
          %v1226 = vpop.f32.mrf.mxu0
          %v1227 = vadd.f32 %v1066, %v1226
          %v1228 = vpop.f32.mrf.mxu0
          %1229 = vmatprep.mubr.bf16.mxu0 %v703
          %1230 = vmatmul.mubr.bf16.gmra.mxu0 %v702
          %v1231 = vpop.f32.mrf.mxu0
          %v1232 = vadd.f32 %v1071, %v1231
          %v1233 = vpop.f32.mrf.mxu0
          %v1234 = vpop.f32.mrf.mxu0
          %v1235 = vadd.f32 %v1074, %v1234
          %v1236 = vpop.f32.mrf.mxu0
          %1237 = vmatprep.mubr.bf16.mxu0 %v707
          %1238 = vmatmul.mubr.bf16.gmra.mxu0 %v706
          %v1239 = vpop.f32.mrf.mxu0
          %v1240 = vadd.f32 %v1079, %v1239
          %v1241 = vpop.f32.mrf.mxu0
          %v1242 = vpop.f32.mrf.mxu0
          %v1243 = vadd.f32 %v1082, %v1242
          %v1244 = vpop.f32.mrf.mxu0
          %1245 = vmatprep.mubr.bf16.mxu0 %v711
          %1246 = vmatmul.mubr.bf16.gmra.mxu0 %v710
          %v1247 = vpop.f32.mrf.mxu0
          %v1248 = vadd.f32 %v1087, %v1247
          %v1249 = vpop.f32.mrf.mxu0
          %v1250 = vpop.f32.mrf.mxu0
          %v1251 = vadd.f32 %v1090, %v1250
          %v1252 = vpop.f32.mrf.mxu0
          %1253 = vmatprep.mubr.bf16.mxu0 %v715
          %1254 = vmatmul.mubr.bf16.gmra.mxu0 %v714
          %v1255 = vpop.f32.mrf.mxu0
          %v1256 = vadd.f32 %v1095, %v1255
          %v1257 = vpop.f32.mrf.mxu0
          %v1258 = vpop.f32.mrf.mxu0
          %v1259 = vadd.f32 %v1098, %v1258
          %v1260 = vpop.f32.mrf.mxu0
          %1261 = vmatprep.mubr.bf16.mxu0 %v719
          %1262 = vmatmul.mubr.bf16.gmra.mxu0 %v718
          %v1263 = vpop.f32.mrf.mxu0
          %v1264 = vadd.f32 %v1103, %v1263
          %v1265 = vpop.f32.mrf.mxu0
          %v1266 = vpop.f32.mrf.mxu0
          %v1267 = vadd.f32 %v1106, %v1266
          %v1268 = vpop.f32.mrf.mxu0
          %1269 = vmatprep.mubr.bf16.mxu0 %v723
          %1270 = vmatmul.mubr.bf16.gmra.mxu0 %v722
          %v1271 = vpop.f32.mrf.mxu0
          %v1272 = vadd.f32 %v1111, %v1271
          %v1273 = vpop.f32.mrf.mxu0
          %v1274 = vpop.f32.mrf.mxu0
          %v1275 = vadd.f32 %v1114, %v1274
          %v1276 = vpop.f32.mrf.mxu0
          %1277 = vmatprep.mubr.bf16.mxu0 %v727
          %1278 = vmatmul.mubr.bf16.gmra.mxu0 %v726
          %v1279 = vpop.f32.mrf.mxu0
          %v1280 = vadd.f32 %v1119, %v1279
          %v1281 = vpop.f32.mrf.mxu0
          %v1282 = vpop.f32.mrf.mxu0
          %v1283 = vadd.f32 %v1122, %v1282
          %v1284 = vpop.f32.mrf.mxu0
          %1285 = vmatprep.mubr.bf16.mxu0 %v731
          %1286 = vmatmul.mubr.bf16.gmra.mxu0 %v730
          %v1287 = vpop.f32.mrf.mxu0
          %v1288 = vadd.f32 %v1127, %v1287
          %v1289 = vpop.f32.mrf.mxu0
          %v1290 = vpop.f32.mrf.mxu0
          %v1291 = vadd.f32 %v1130, %v1290
          %v1292 = vpop.f32.mrf.mxu0
          %1293 = vmatprep.mubr.bf16.mxu0 %v735
          %1294 = vmatmul.mubr.bf16.gmra.mxu0 %v734
          %v1295 = vpop.f32.mrf.mxu0
          %v1296 = vadd.f32 %v1135, %v1295
          %v1297 = vpop.f32.mrf.mxu0
          %v1298 = vpop.f32.mrf.mxu0
          %v1299 = vadd.f32 %v1138, %v1298
          %v1300 = vpop.f32.mrf.mxu0
          %1301 = vmatprep.mubr.bf16.mxu0 %v739
          %1302 = vmatmul.mubr.bf16.gmra.mxu0 %v738
          %v1303 = vpop.f32.mrf.mxu0
          %v1304 = vadd.f32 %v1143, %v1303
          %v1305 = vpop.f32.mrf.mxu0
          %v1306 = vpop.f32.mrf.mxu0
          %v1307 = vadd.f32 %v1146, %v1306
          %v1308 = vpop.f32.mrf.mxu0
          %1309 = vmatprep.mubr.bf16.mxu0 %v743
          %1310 = vmatmul.mubr.bf16.gmra.mxu0 %v742
          %v1311 = vpop.f32.mrf.mxu0
          %v1312 = vadd.f32 %v1151, %v1311
          %v1313 = vpop.f32.mrf.mxu0
          %v1314 = vpop.f32.mrf.mxu0
          %v1315 = vadd.f32 %v1154, %v1314
          %v1316 = vpop.f32.mrf.mxu0
          %1317 = vmatprep.mubr.bf16.mxu0 %v747
          %1318 = vmatmul.mubr.bf16.gmra.mxu0 %v746
          %v1319 = vpop.f32.mrf.mxu0
          %v1320 = vadd.f32 %v1159, %v1319
          %v1321 = vpop.f32.mrf.mxu0
          %v1322 = vpop.f32.mrf.mxu0
          %v1323 = vadd.f32 %v1162, %v1322
          %v1324 = vpop.f32.mrf.mxu0
          %1325 = vdwg.mxu0
          %v1326 = vadd.f32 %v396, %v1200
          %v1327 = vadd.f32 %v397, %v1203
          %v1328 = vadd.f32 %v398, %v1208
          %v1329 = vadd.f32 %v399, %v1211
          %v1330 = vadd.f32 %v400, %v1216
          %v1331 = vadd.f32 %v401, %v1219
          %v1332 = vadd.f32 %v402, %v1224
          %v1333 = vadd.f32 %v403, %v1227
          %v1334 = vadd.f32 %v404, %v1232
          %v1335 = vadd.f32 %v405, %v1235
          %v1336 = vadd.f32 %v406, %v1240
          %v1337 = vadd.f32 %v407, %v1243
          %v1338 = vadd.f32 %v408, %v1248
          %v1339 = vadd.f32 %v409, %v1251
          %v1340 = vadd.f32 %v410, %v1256
          %v1341 = vadd.f32 %v411, %v1259
          %v1342 = vadd.f32 %v412, %v1264
          %v1343 = vadd.f32 %v413, %v1267
          %v1344 = vadd.f32 %v414, %v1272
          %v1345 = vadd.f32 %v415, %v1275
          %v1346 = vadd.f32 %v416, %v1280
          %v1347 = vadd.f32 %v417, %v1283
          %v1348 = vadd.f32 %v418, %v1288
          %v1349 = vadd.f32 %v419, %v1291
          %v1350 = vadd.f32 %v420, %v1296
          %v1351 = vadd.f32 %v421, %v1299
          %v1352 = vadd.f32 %v422, %v1304
          %v1353 = vadd.f32 %v423, %v1307
          %v1354 = vadd.f32 %v424, %v1312
          %v1355 = vadd.f32 %v425, %v1315
          %v1356 = vadd.f32 %v426, %v1320
          %v1357 = vadd.f32 %v427, %v1323
          %1358 = vst [vmem:[#allocation2] sm:$0xff] %v1326
          %1359 = vst [vmem:[#allocation2 + $0x8] sm:$0xff] %v1327
          %1360 = vst [vmem:[#allocation2 + $0x10] sm:$0xff] %v1328
          %1361 = vst [vmem:[#allocation2 + $0x18] sm:$0xff] %v1329
          %1362 = vst [vmem:[#allocation2 + $0x20] sm:$0xff] %v1330
          %1363 = vst [vmem:[#allocation2 + $0x28] sm:$0xff] %v1331
          %1364 = vst [vmem:[#allocation2 + $0x30] sm:$0xff] %v1332
          %1365 = vst [vmem:[#allocation2 + $0x38] sm:$0xff] %v1333
          %1366 = vst [vmem:[#allocation2 + $0x40] sm:$0xff] %v1334
          %1367 = vst [vmem:[#allocation2 + $0x48] sm:$0xff] %v1335
          %1368 = vst [vmem:[#allocation2 + $0x50] sm:$0xff] %v1336
          %1369 = vst [vmem:[#allocation2 + $0x58] sm:$0xff] %v1337
          %1370 = vst [vmem:[#allocation2 + $0x60] sm:$0xff] %v1338
          %1371 = vst [vmem:[#allocation2 + $0x68] sm:$0xff] %v1339
          %1372 = vst [vmem:[#allocation2 + $0x70] sm:$0xff] %v1340
          %1373 = vst [vmem:[#allocation2 + $0x78] sm:$0xff] %v1341
          %1374 = vst [vmem:[#allocation2 + $0x80] sm:$0xff] %v1342
          %1375 = vst [vmem:[#allocation2 + $0x88] sm:$0xff] %v1343
          %1376 = vst [vmem:[#allocation2 + $0x90] sm:$0xff] %v1344
          %1377 = vst [vmem:[#allocation2 + $0x98] sm:$0xff] %v1345
          %1378 = vst [vmem:[#allocation2 + $0xa0] sm:$0xff] %v1346
          %1379 = vst [vmem:[#allocation2 + $0xa8] sm:$0xff] %v1347
          %1380 = vst [vmem:[#allocation2 + $0xb0] sm:$0xff] %v1348
          %1381 = vst [vmem:[#allocation2 + $0xb8] sm:$0xff] %v1349
          %1382 = vst [vmem:[#allocation2 + $0xc0] sm:$0xff] %v1350
          %1383 = vst [vmem:[#allocation2 + $0xc8] sm:$0xff] %v1351
          %1384 = vst [vmem:[#allocation2 + $0xd0] sm:$0xff] %v1352
          %1385 = vst [vmem:[#allocation2 + $0xd8] sm:$0xff] %v1353
          %1386 = vst [vmem:[#allocation2 + $0xe0] sm:$0xff] %v1354
          %1387 = vst [vmem:[#allocation2 + $0xe8] sm:$0xff] %v1355
          %1388 = vst [vmem:[#allocation2 + $0xf0] sm:$0xff] %v1356
          %1389 = vst [vmem:[#allocation2 + $0xf8] sm:$0xff] %v1357
        $region60: #{tpu_custom_call.1} parent=35 // pred_fallthru
          _
        %p1390 = scmp.eq.s32.totalorder %s33, 1
        // Predicated region
        $region61: #{tpu_custom_call.1} parent=35 // pred_check
          %p1391 = pneg %p1390
        $region62: #{tpu_custom_call.1} parent=35 // pred_check_branch
          %1393 = sbr.rel (%p1391) target = $region64
        $region63: #{tpu_custom_call.1} parent=35 // pred_region
          %v1394 = vld [vmem:[#allocation2] sm:$0xff]
          %v1395 = vld [vmem:[#allocation2 + $0x8] sm:$0xff]
          %v1396 = vld [vmem:[#allocation2 + $0x10] sm:$0xff]
          %v1397 = vld [vmem:[#allocation2 + $0x18] sm:$0xff]
          %v1398 = vld [vmem:[#allocation2 + $0x20] sm:$0xff]
          %v1399 = vld [vmem:[#allocation2 + $0x28] sm:$0xff]
          %v1400 = vld [vmem:[#allocation2 + $0x30] sm:$0xff]
          %v1401 = vld [vmem:[#allocation2 + $0x38] sm:$0xff]
          %v1402 = vld [vmem:[#allocation2 + $0x40] sm:$0xff]
          %v1403 = vld [vmem:[#allocation2 + $0x48] sm:$0xff]
          %v1404 = vld [vmem:[#allocation2 + $0x50] sm:$0xff]
          %v1405 = vld [vmem:[#allocation2 + $0x58] sm:$0xff]
          %v1406 = vld [vmem:[#allocation2 + $0x60] sm:$0xff]
          %v1407 = vld [vmem:[#allocation2 + $0x68] sm:$0xff]
          %v1408 = vld [vmem:[#allocation2 + $0x70] sm:$0xff]
          %v1409 = vld [vmem:[#allocation2 + $0x78] sm:$0xff]
          %v1410 = vld [vmem:[#allocation2 + $0x80] sm:$0xff]
          %v1411 = vld [vmem:[#allocation2 + $0x88] sm:$0xff]
          %v1412 = vld [vmem:[#allocation2 + $0x90] sm:$0xff]
          %v1413 = vld [vmem:[#allocation2 + $0x98] sm:$0xff]
          %v1414 = vld [vmem:[#allocation2 + $0xa0] sm:$0xff]
          %v1415 = vld [vmem:[#allocation2 + $0xa8] sm:$0xff]
          %v1416 = vld [vmem:[#allocation2 + $0xb0] sm:$0xff]
          %v1417 = vld [vmem:[#allocation2 + $0xb8] sm:$0xff]
          %v1418 = vld [vmem:[#allocation2 + $0xc0] sm:$0xff]
          %v1419 = vld [vmem:[#allocation2 + $0xc8] sm:$0xff]
          %v1420 = vld [vmem:[#allocation2 + $0xd0] sm:$0xff]
          %v1421 = vld [vmem:[#allocation2 + $0xd8] sm:$0xff]
          %v1422 = vld [vmem:[#allocation2 + $0xe0] sm:$0xff]
          %v1423 = vld [vmem:[#allocation2 + $0xe8] sm:$0xff]
          %v1424 = vld [vmem:[#allocation2 + $0xf0] sm:$0xff]
          %v1425 = vld [vmem:[#allocation2 + $0xf8] sm:$0xff]
          %v1426 = vld [vmem:[#allocation10] sm:$0x1]
          %v1428 = vlaneseq
          %v1429 = vshrl.u32 %v1428, 7
          %v1430 = vsub.s32 0, %v1429
          %v1431 = vrot.slane %v1426, %v1430
          %v1433 = vadd.f32 %v1394, %v1431
          %v1434 = vadd.f32 %v1395, %v1431
          %v1435 = vadd.f32 %v1396, %v1431
          %v1436 = vadd.f32 %v1397, %v1431
          %v1437 = vadd.f32 %v1398, %v1431
          %v1438 = vadd.f32 %v1399, %v1431
          %v1439 = vadd.f32 %v1400, %v1431
          %v1440 = vadd.f32 %v1401, %v1431
          %v1441 = vadd.f32 %v1402, %v1431
          %v1442 = vadd.f32 %v1403, %v1431
          %v1443 = vadd.f32 %v1404, %v1431
          %v1444 = vadd.f32 %v1405, %v1431
          %v1445 = vadd.f32 %v1406, %v1431
          %v1446 = vadd.f32 %v1407, %v1431
          %v1447 = vadd.f32 %v1408, %v1431
          %v1448 = vadd.f32 %v1409, %v1431
          %v1449 = vadd.f32 %v1410, %v1431
          %v1450 = vadd.f32 %v1411, %v1431
          %v1451 = vadd.f32 %v1412, %v1431
          %v1452 = vadd.f32 %v1413, %v1431
          %v1453 = vadd.f32 %v1414, %v1431
          %v1454 = vadd.f32 %v1415, %v1431
          %v1455 = vadd.f32 %v1416, %v1431
          %v1456 = vadd.f32 %v1417, %v1431
          %v1457 = vadd.f32 %v1418, %v1431
          %v1458 = vadd.f32 %v1419, %v1431
          %v1459 = vadd.f32 %v1420, %v1431
          %v1460 = vadd.f32 %v1421, %v1431
          %v1461 = vadd.f32 %v1422, %v1431
          %v1462 = vadd.f32 %v1423, %v1431
          %v1463 = vadd.f32 %v1424, %v1431
          %v1464 = vadd.f32 %v1425, %v1431
          %v1465 = vmax.f32 %v1433, 0.0
          %v1466 = vmax.f32 %v1434, 0.0
          %v1467 = vmax.f32 %v1435, 0.0
          %v1468 = vmax.f32 %v1436, 0.0
          %v1469 = vmax.f32 %v1437, 0.0
          %v1470 = vmax.f32 %v1438, 0.0
          %v1471 = vmax.f32 %v1439, 0.0
          %v1472 = vmax.f32 %v1440, 0.0
          %v1473 = vmax.f32 %v1441, 0.0
          %v1474 = vmax.f32 %v1442, 0.0
          %v1475 = vmax.f32 %v1443, 0.0
          %v1476 = vmax.f32 %v1444, 0.0
          %v1477 = vmax.f32 %v1445, 0.0
          %v1478 = vmax.f32 %v1446, 0.0
          %v1479 = vmax.f32 %v1447, 0.0
          %v1480 = vmax.f32 %v1448, 0.0
          %v1481 = vmax.f32 %v1449, 0.0
          %v1482 = vmax.f32 %v1450, 0.0
          %v1483 = vmax.f32 %v1451, 0.0
          %v1484 = vmax.f32 %v1452, 0.0
          %v1485 = vmax.f32 %v1453, 0.0
          %v1486 = vmax.f32 %v1454, 0.0
          %v1487 = vmax.f32 %v1455, 0.0
          %v1488 = vmax.f32 %v1456, 0.0
          %v1489 = vmax.f32 %v1457, 0.0
          %v1490 = vmax.f32 %v1458, 0.0
          %v1491 = vmax.f32 %v1459, 0.0
          %v1492 = vmax.f32 %v1460, 0.0
          %v1493 = vmax.f32 %v1461, 0.0
          %v1494 = vmax.f32 %v1462, 0.0
          %v1495 = vmax.f32 %v1463, 0.0
          %v1496 = vmax.f32 %v1464, 0.0
          %v1497 = vpack.c.bf16 %v1466, %v1465
          %v1498 = vpack.c.bf16 %v1468, %v1467
          %v1499 = vpack.c.bf16 %v1470, %v1469
          %v1500 = vpack.c.bf16 %v1472, %v1471
          %v1501 = vpack.c.bf16 %v1474, %v1473
          %v1502 = vpack.c.bf16 %v1476, %v1475
          %v1503 = vpack.c.bf16 %v1478, %v1477
          %v1504 = vpack.c.bf16 %v1480, %v1479
          %v1505 = vpack.c.bf16 %v1482, %v1481
          %v1506 = vpack.c.bf16 %v1484, %v1483
          %v1507 = vpack.c.bf16 %v1486, %v1485
          %v1508 = vpack.c.bf16 %v1488, %v1487
          %v1509 = vpack.c.bf16 %v1490, %v1489
          %v1510 = vpack.c.bf16 %v1492, %v1491
          %v1511 = vpack.c.bf16 %v1494, %v1493
          %v1512 = vpack.c.bf16 %v1496, %v1495
          %v1513 = vld [vmem:[#allocation11] sm:$0xf]
          %v1514 = vld [vmem:[#allocation11 + $0x4] sm:$0xf]
          %v1515 = vld [vmem:[#allocation11 + $0x8] sm:$0xf]
          %v1516 = vld [vmem:[#allocation11 + $0xc] sm:$0xf]
          %v1517 = vld [vmem:[#allocation11 + $0x10] sm:$0xf]
          %v1518 = vld [vmem:[#allocation11 + $0x14] sm:$0xf]
          %v1519 = vld [vmem:[#allocation11 + $0x18] sm:$0xf]
          %v1520 = vld [vmem:[#allocation11 + $0x1c] sm:$0xf]
          %v1521 = vld [vmem:[#allocation11 + $0x20] sm:$0xf]
          %v1522 = vld [vmem:[#allocation11 + $0x24] sm:$0xf]
          %v1523 = vld [vmem:[#allocation11 + $0x28] sm:$0xf]
          %v1524 = vld [vmem:[#allocation11 + $0x2c] sm:$0xf]
          %v1525 = vld [vmem:[#allocation11 + $0x30] sm:$0xf]
          %v1526 = vld [vmem:[#allocation11 + $0x34] sm:$0xf]
          %v1527 = vld [vmem:[#allocation11 + $0x38] sm:$0xf]
          %v1528 = vld [vmem:[#allocation11 + $0x3c] sm:$0xf]
          %v1545 = vunpack.c.l.b16 %v1513
          %v1546 = vunpack.c.l.b16 %v1514
          %v1547 = vunpack.c.l.b16 %v1515
          %v1548 = vunpack.c.l.b16 %v1516
          %v1549 = vunpack.c.l.b16 %v1517
          %v1550 = vunpack.c.l.b16 %v1518
          %v1551 = vunpack.c.l.b16 %v1519
          %v1552 = vunpack.c.l.b16 %v1520
          %v1553 = vunpack.c.l.b16 %v1521
          %v1554 = vunpack.c.l.b16 %v1522
          %v1555 = vunpack.c.l.b16 %v1523
          %v1556 = vunpack.c.l.b16 %v1524
          %v1557 = vunpack.c.l.b16 %v1525
          %v1558 = vunpack.c.l.b16 %v1526
          %v1559 = vunpack.c.l.b16 %v1527
          %v1560 = vunpack.c.l.b16 %v1528
          %v1561 = vpack.c.b16 %v1546, %v1545
          %v1562 = vpack.c.b16 %v1548, %v1547
          %v1563 = vpack.c.b16 %v1550, %v1549
          %v1564 = vpack.c.b16 %v1552, %v1551
          %v1565 = vpack.c.b16 %v1554, %v1553
          %v1566 = vpack.c.b16 %v1556, %v1555
          %v1567 = vpack.c.b16 %v1558, %v1557
          %v1568 = vpack.c.b16 %v1560, %v1559
          %1577 = vmatprep.subr.bf16.mxu0 0
          %1578 = vmatpush1.bf16.msra.mxu0 %v1568
          %1579 = vmatprep.subr.bf16.mxu0 0
          %1580 = vmatpush1.bf16.msra.mxu0 %v1567
          %1581 = vmatprep.subr.bf16.mxu0 0
          %1582 = vmatpush1.bf16.msra.mxu0 %v1566
          %1583 = vmatprep.subr.bf16.mxu0 0
          %1584 = vmatpush1.bf16.msra.mxu0 %v1565
          %1585 = vmatprep.subr.bf16.mxu0 0
          %1586 = vmatpush1.bf16.msra.mxu0 %v1564
          %1587 = vmatprep.subr.bf16.mxu0 0
          %1588 = vmatpush1.bf16.msra.mxu0 %v1563
          %1589 = vmatprep.subr.bf16.mxu0 0
          %1590 = vmatpush1.bf16.msra.mxu0 %v1562
          %1591 = vmatprep.subr.bf16.mxu0 0
          %1592 = vmatpush1.bf16.msra.mxu0 %v1561
          %1593 = vmatprep.subr.bf16.mxu0 0
          %1594 = vmatpush2.bf16.msra.mxu0 0
          %1595 = vmatprep.subr.bf16.mxu0 0
          %1596 = vmatpush2.bf16.msra.mxu0 0
          %1597 = vmatprep.subr.bf16.mxu0 0
          %1598 = vmatpush2.bf16.msra.mxu0 0
          %1599 = vmatprep.subr.bf16.mxu0 0
          %1600 = vmatpush2.bf16.msra.mxu0 0
          %1601 = vmatprep.subr.bf16.mxu0 0
          %1602 = vmatpush2.bf16.msra.mxu0 0
          %1603 = vmatprep.subr.bf16.mxu0 0
          %1604 = vmatpush2.bf16.msra.mxu0 0
          %1605 = vmatprep.subr.bf16.mxu0 0
          %1606 = vmatpush2.bf16.msra.mxu0 0
          %1607 = vmatprep.subr.bf16.mxu0 0
          %1608 = vmatpush2.bf16.msra.mxu0 0
          %1609 = vmatprep.mubr.bf16.mxu0 0
          %1610 = vmatmul.mubr.bf16.gmra.mxu0 %v1497
          %v1611 = vpop.f32.mrf.mxu0
          %v1612 = vadd.f32 0.0, %v1611
          %v1613 = vpop.f32.mrf.mxu0
          %v1614 = vpop.f32.mrf.mxu0
          %v1615 = vadd.f32 0.0, %v1614
          %v1616 = vpop.f32.mrf.mxu0
          %1617 = vmatprep.mubr.bf16.mxu0 0
          %1618 = vmatmul.mubr.bf16.gmra.mxu0 %v1498
          %v1619 = vpop.f32.mrf.mxu0
          %v1620 = vadd.f32 0.0, %v1619
          %v1621 = vpop.f32.mrf.mxu0
          %v1622 = vpop.f32.mrf.mxu0
          %v1623 = vadd.f32 0.0, %v1622
          %v1624 = vpop.f32.mrf.mxu0
          %1625 = vmatprep.mubr.bf16.mxu0 0
          %1626 = vmatmul.mubr.bf16.gmra.mxu0 %v1499
          %v1627 = vpop.f32.mrf.mxu0
          %v1628 = vadd.f32 0.0, %v1627
          %v1629 = vpop.f32.mrf.mxu0
          %v1630 = vpop.f32.mrf.mxu0
          %v1631 = vadd.f32 0.0, %v1630
          %v1632 = vpop.f32.mrf.mxu0
          %1633 = vmatprep.mubr.bf16.mxu0 0
          %1634 = vmatmul.mubr.bf16.gmra.mxu0 %v1500
          %v1635 = vpop.f32.mrf.mxu0
          %v1636 = vadd.f32 0.0, %v1635
          %v1637 = vpop.f32.mrf.mxu0
          %v1638 = vpop.f32.mrf.mxu0
          %v1639 = vadd.f32 0.0, %v1638
          %v1640 = vpop.f32.mrf.mxu0
          %1641 = vmatprep.mubr.bf16.mxu0 0
          %1642 = vmatmul.mubr.bf16.gmra.mxu0 %v1501
          %v1643 = vpop.f32.mrf.mxu0
          %v1644 = vadd.f32 0.0, %v1643
          %v1645 = vpop.f32.mrf.mxu0
          %v1646 = vpop.f32.mrf.mxu0
          %v1647 = vadd.f32 0.0, %v1646
          %v1648 = vpop.f32.mrf.mxu0
          %1649 = vmatprep.mubr.bf16.mxu0 0
          %1650 = vmatmul.mubr.bf16.gmra.mxu0 %v1502
          %v1651 = vpop.f32.mrf.mxu0
          %v1652 = vadd.f32 0.0, %v1651
          %v1653 = vpop.f32.mrf.mxu0
          %v1654 = vpop.f32.mrf.mxu0
          %v1655 = vadd.f32 0.0, %v1654
          %v1656 = vpop.f32.mrf.mxu0
          %1657 = vmatprep.mubr.bf16.mxu0 0
          %1658 = vmatmul.mubr.bf16.gmra.mxu0 %v1503
          %v1659 = vpop.f32.mrf.mxu0
          %v1660 = vadd.f32 0.0, %v1659
          %v1661 = vpop.f32.mrf.mxu0
          %v1662 = vpop.f32.mrf.mxu0
          %v1663 = vadd.f32 0.0, %v1662
          %v1664 = vpop.f32.mrf.mxu0
          %1665 = vmatprep.mubr.bf16.mxu0 0
          %1666 = vmatmul.mubr.bf16.gmra.mxu0 %v1504
          %v1667 = vpop.f32.mrf.mxu0
          %v1668 = vadd.f32 0.0, %v1667
          %v1669 = vpop.f32.mrf.mxu0
          %v1670 = vpop.f32.mrf.mxu0
          %v1671 = vadd.f32 0.0, %v1670
          %v1672 = vpop.f32.mrf.mxu0
          %1673 = vmatprep.mubr.bf16.mxu0 0
          %1674 = vmatmul.mubr.bf16.gmra.mxu0 %v1505
          %v1675 = vpop.f32.mrf.mxu0
          %v1676 = vadd.f32 0.0, %v1675
          %v1677 = vpop.f32.mrf.mxu0
          %v1678 = vpop.f32.mrf.mxu0
          %v1679 = vadd.f32 0.0, %v1678
          %v1680 = vpop.f32.mrf.mxu0
          %1681 = vmatprep.mubr.bf16.mxu0 0
          %1682 = vmatmul.mubr.bf16.gmra.mxu0 %v1506
          %v1683 = vpop.f32.mrf.mxu0
          %v1684 = vadd.f32 0.0, %v1683
          %v1685 = vpop.f32.mrf.mxu0
          %v1686 = vpop.f32.mrf.mxu0
          %v1687 = vadd.f32 0.0, %v1686
          %v1688 = vpop.f32.mrf.mxu0
          %1689 = vmatprep.mubr.bf16.mxu0 0
          %1690 = vmatmul.mubr.bf16.gmra.mxu0 %v1507
          %v1691 = vpop.f32.mrf.mxu0
          %v1692 = vadd.f32 0.0, %v1691
          %v1693 = vpop.f32.mrf.mxu0
          %v1694 = vpop.f32.mrf.mxu0
          %v1695 = vadd.f32 0.0, %v1694
          %v1696 = vpop.f32.mrf.mxu0
          %1697 = vmatprep.mubr.bf16.mxu0 0
          %1698 = vmatmul.mubr.bf16.gmra.mxu0 %v1508
          %v1699 = vpop.f32.mrf.mxu0
          %v1700 = vadd.f32 0.0, %v1699
          %v1701 = vpop.f32.mrf.mxu0
          %v1702 = vpop.f32.mrf.mxu0
          %v1703 = vadd.f32 0.0, %v1702
          %v1704 = vpop.f32.mrf.mxu0
          %1705 = vmatprep.mubr.bf16.mxu0 0
          %1706 = vmatmul.mubr.bf16.gmra.mxu0 %v1509
          %v1707 = vpop.f32.mrf.mxu0
          %v1708 = vadd.f32 0.0, %v1707
          %v1709 = vpop.f32.mrf.mxu0
          %v1710 = vpop.f32.mrf.mxu0
          %v1711 = vadd.f32 0.0, %v1710
          %v1712 = vpop.f32.mrf.mxu0
          %1713 = vmatprep.mubr.bf16.mxu0 0
          %1714 = vmatmul.mubr.bf16.gmra.mxu0 %v1510
          %v1715 = vpop.f32.mrf.mxu0
          %v1716 = vadd.f32 0.0, %v1715
          %v1717 = vpop.f32.mrf.mxu0
          %v1718 = vpop.f32.mrf.mxu0
          %v1719 = vadd.f32 0.0, %v1718
          %v1720 = vpop.f32.mrf.mxu0
          %1721 = vmatprep.mubr.bf16.mxu0 0
          %1722 = vmatmul.mubr.bf16.gmra.mxu0 %v1511
          %v1723 = vpop.f32.mrf.mxu0
          %v1724 = vadd.f32 0.0, %v1723
          %v1725 = vpop.f32.mrf.mxu0
          %v1726 = vpop.f32.mrf.mxu0
          %v1727 = vadd.f32 0.0, %v1726
          %v1728 = vpop.f32.mrf.mxu0
          %1729 = vmatprep.mubr.bf16.mxu0 0
          %1730 = vmatmul.mubr.bf16.gmra.mxu0 %v1512
          %v1731 = vpop.f32.mrf.mxu0
          %v1732 = vadd.f32 0.0, %v1731
          %v1733 = vpop.f32.mrf.mxu0
          %v1734 = vpop.f32.mrf.mxu0
          %v1735 = vadd.f32 0.0, %v1734
          %v1736 = vpop.f32.mrf.mxu0
          %1737 = vdwg.mxu0
          %v1738 = vpack.c.bf16 %v1615, %v1612
          %v1739 = vpack.c.bf16 %v1623, %v1620
          %v1740 = vpack.c.bf16 %v1631, %v1628
          %v1741 = vpack.c.bf16 %v1639, %v1636
          %v1742 = vpack.c.bf16 %v1647, %v1644
          %v1743 = vpack.c.bf16 %v1655, %v1652
          %v1744 = vpack.c.bf16 %v1663, %v1660
          %v1745 = vpack.c.bf16 %v1671, %v1668
          %v1746 = vpack.c.bf16 %v1679, %v1676
          %v1747 = vpack.c.bf16 %v1687, %v1684
          %v1748 = vpack.c.bf16 %v1695, %v1692
          %v1749 = vpack.c.bf16 %v1703, %v1700
          %v1750 = vpack.c.bf16 %v1711, %v1708
          %v1751 = vpack.c.bf16 %v1719, %v1716
          %v1752 = vpack.c.bf16 %v1727, %v1724
          %v1753 = vpack.c.bf16 %v1735, %v1732
          %v1770 = vunpack.c.l.b16 %v1738
          %v1771 = vunpack.c.h.b16 %v1738
          %v1772 = vunpack.c.l.b16 %v1739
          %v1773 = vunpack.c.h.b16 %v1739
          %v1774 = vunpack.c.l.b16 %v1740
          %v1775 = vunpack.c.h.b16 %v1740
          %v1776 = vunpack.c.l.b16 %v1741
          %v1777 = vunpack.c.h.b16 %v1741
          %v1778 = vunpack.c.l.b16 %v1742
          %v1779 = vunpack.c.h.b16 %v1742
          %v1780 = vunpack.c.l.b16 %v1743
          %v1781 = vunpack.c.h.b16 %v1743
          %v1782 = vunpack.c.l.b16 %v1744
          %v1783 = vunpack.c.h.b16 %v1744
          %v1784 = vunpack.c.l.b16 %v1745
          %v1785 = vunpack.c.h.b16 %v1745
          %v1786 = vunpack.c.l.b16 %v1746
          %v1787 = vunpack.c.h.b16 %v1746
          %v1788 = vunpack.c.l.b16 %v1747
          %v1789 = vunpack.c.h.b16 %v1747
          %v1790 = vunpack.c.l.b16 %v1748
          %v1791 = vunpack.c.h.b16 %v1748
          %v1792 = vunpack.c.l.b16 %v1749
          %v1793 = vunpack.c.h.b16 %v1749
          %v1794 = vunpack.c.l.b16 %v1750
          %v1795 = vunpack.c.h.b16 %v1750
          %v1796 = vunpack.c.l.b16 %v1751
          %v1797 = vunpack.c.h.b16 %v1751
          %v1798 = vunpack.c.l.b16 %v1752
          %v1799 = vunpack.c.h.b16 %v1752
          %v1800 = vunpack.c.l.b16 %v1753
          %v1801 = vunpack.c.h.b16 %v1753
          %v1802 = vpack.c.b16 %v1770, %v1770
          %v1803 = vpack.c.b16 %v1771, %v1771
          %v1804 = vpack.c.b16 %v1772, %v1772
          %v1805 = vpack.c.b16 %v1773, %v1773
          %v1806 = vpack.c.b16 %v1774, %v1774
          %v1807 = vpack.c.b16 %v1775, %v1775
          %v1808 = vpack.c.b16 %v1776, %v1776
          %v1809 = vpack.c.b16 %v1777, %v1777
          %v1810 = vpack.c.b16 %v1778, %v1778
          %v1811 = vpack.c.b16 %v1779, %v1779
          %v1812 = vpack.c.b16 %v1780, %v1780
          %v1813 = vpack.c.b16 %v1781, %v1781
          %v1814 = vpack.c.b16 %v1782, %v1782
          %v1815 = vpack.c.b16 %v1783, %v1783
          %v1816 = vpack.c.b16 %v1784, %v1784
          %v1817 = vpack.c.b16 %v1785, %v1785
          %v1818 = vpack.c.b16 %v1786, %v1786
          %v1819 = vpack.c.b16 %v1787, %v1787
          %v1820 = vpack.c.b16 %v1788, %v1788
          %v1821 = vpack.c.b16 %v1789, %v1789
          %v1822 = vpack.c.b16 %v1790, %v1790
          %v1823 = vpack.c.b16 %v1791, %v1791
          %v1824 = vpack.c.b16 %v1792, %v1792
          %v1825 = vpack.c.b16 %v1793, %v1793
          %v1826 = vpack.c.b16 %v1794, %v1794
          %v1827 = vpack.c.b16 %v1795, %v1795
          %v1828 = vpack.c.b16 %v1796, %v1796
          %v1829 = vpack.c.b16 %v1797, %v1797
          %v1830 = vpack.c.b16 %v1798, %v1798
          %v1831 = vpack.c.b16 %v1799, %v1799
          %v1832 = vpack.c.b16 %v1800, %v1800
          %v1833 = vpack.c.b16 %v1801, %v1801
          %1866 = vst [vmem:[%s279] sm:$0xf] %v1802
          %1867 = vst [vmem:[%s279 + $0x4] sm:$0xf] %v1803
          %1868 = vst [vmem:[%s279 + $0x8] sm:$0xf] %v1804
          %1869 = vst [vmem:[%s279 + $0xc] sm:$0xf] %v1805
          %1870 = vst [vmem:[%s279 + $0x10] sm:$0xf] %v1806
          %1871 = vst [vmem:[%s279 + $0x14] sm:$0xf] %v1807
          %1872 = vst [vmem:[%s279 + $0x18] sm:$0xf] %v1808
          %1873 = vst [vmem:[%s279 + $0x1c] sm:$0xf] %v1809
          %1874 = vst [vmem:[%s279 + $0x20] sm:$0xf] %v1810
          %1875 = vst [vmem:[%s279 + $0x24] sm:$0xf] %v1811
          %1876 = vst [vmem:[%s279 + $0x28] sm:$0xf] %v1812
          %1877 = vst [vmem:[%s279 + $0x2c] sm:$0xf] %v1813
          %1878 = vst [vmem:[%s279 + $0x30] sm:$0xf] %v1814
          %1879 = vst [vmem:[%s279 + $0x34] sm:$0xf] %v1815
          %1880 = vst [vmem:[%s279 + $0x38] sm:$0xf] %v1816
          %1881 = vst [vmem:[%s279 + $0x3c] sm:$0xf] %v1817
          %1882 = vst [vmem:[%s279 + $0x40] sm:$0xf] %v1818
          %1883 = vst [vmem:[%s279 + $0x44] sm:$0xf] %v1819
          %1884 = vst [vmem:[%s279 + $0x48] sm:$0xf] %v1820
          %1885 = vst [vmem:[%s279 + $0x4c] sm:$0xf] %v1821
          %1886 = vst [vmem:[%s279 + $0x50] sm:$0xf] %v1822
          %1887 = vst [vmem:[%s279 + $0x54] sm:$0xf] %v1823
          %1888 = vst [vmem:[%s279 + $0x58] sm:$0xf] %v1824
          %1889 = vst [vmem:[%s279 + $0x5c] sm:$0xf] %v1825
          %1890 = vst [vmem:[%s279 + $0x60] sm:$0xf] %v1826
          %1891 = vst [vmem:[%s279 + $0x64] sm:$0xf] %v1827
          %1892 = vst [vmem:[%s279 + $0x68] sm:$0xf] %v1828
          %1893 = vst [vmem:[%s279 + $0x6c] sm:$0xf] %v1829
          %1894 = vst [vmem:[%s279 + $0x70] sm:$0xf] %v1830
          %1895 = vst [vmem:[%s279 + $0x74] sm:$0xf] %v1831
          %1896 = vst [vmem:[%s279 + $0x78] sm:$0xf] %v1832
          %1897 = vst [vmem:[%s279 + $0x7c] sm:$0xf] %v1833
        $region64: #{tpu_custom_call.1} parent=35 // pred_fallthru
          _
        %s1898 = sand.u32 %s139, 1
        %s1899 = scalar_lea.sflag [#allocation7], %s1898
        %s1900 = sand.u32 %s139, 1
        %s1901 = smul.addr %s1900, 128
        %s1902 = scalar_lea.vmem [#allocation13], %s1901
        // Predicated region
        $region65: #{tpu_custom_call.1} parent=35 // pred_check
          %p1903 = pneg %p149
        $region66: #{tpu_custom_call.1} parent=35 // pred_check_branch
          %1905 = sbr.rel (%p1903) target = $region68
        $region67: #{tpu_custom_call.1} parent=35 // pred_region
          %s1906 = smul.u32 32, %s32
          %s1908 = ssub.s32 2048, 2048
          %1909 = vsyncadd %s1899, %s1908
          %s1910 = smul.addr %s1906, 64
          %s1911 = scalar_lea.hbm %s5, %s1910
          %s1912 = sshll.u32 %s1902, 4
          %s1913 = int_to_ptr.vmem [resolvable:$true] %s1912
          %1918 = dma.vmem_to_hbm [thread:$0]  %s1913, 2048, %s1911, %s1899, 64, 64, 4
        $region68: #{tpu_custom_call.1} parent=35 // pred_fallthru
          _
      $region36: #{tpu_custom_call.1} parent=5 // pred_fallthru
        _
      %p1919 = scmp.le.s32.totalorder 2, %s23
      // Predicated region
      $region69: #{tpu_custom_call.1} parent=5 // pred_check
        %p1920 = pneg %p1919
      $region70: #{tpu_custom_call.1} parent=5 // pred_check_branch
        %1922 = sbr.rel (%p1920) target = $region72
      $region71: #{tpu_custom_call.1} parent=5 // pred_region
        %s1923 = ssub.s32 %s23, 2
        // Predicated region
        $region73: #{tpu_custom_call.1} parent=71 // pred_check
          %p1924 = pneg %p155
        $region74: #{tpu_custom_call.1} parent=71 // pred_check_branch
          %1926 = sbr.rel (%p1924) target = $region76
        $region75: #{tpu_custom_call.1} parent=71 // pred_region
          %s1927 = sand.u32 %s140, 1
          %s1928 = scalar_lea.sflag [#allocation7], %s1927
          %s1929 = sand.u32 %s140, 1
          %s1930 = smul.addr %s1929, 128
          %s1931 = scalar_lea.vmem [#allocation13], %s1930
          %1932 = dma.done %s1928, 2048
        $region76: #{tpu_custom_call.1} parent=71 // pred_fallthru
          _
      $region72: #{tpu_custom_call.1} parent=5 // pred_fallthru
        _
    $region6: #{tpu_custom_call.1} parent=1 // loop_footer
      %s27 = sadd.s32 1, %s23
    $region7: #{tpu_custom_call.1} parent=1 // loop_footer_branch
      %22 = sbr.rel target = $region3
    $region8: #{tpu_custom_call.1} parent=1 // loop_exit
      _
    %1933 = vsyncpa [#allocation6], 1
    %s1934 = scalar_lea.sflag [#allocation6], 1
    %1935 = vsyncpa %s1934, 1
    %1936 = vsyncpa [#allocation9], 1
    %1937 = vsyncpa [#allocation12], 1
    %1938 = vsyncpa [#allocation7], 1
    %s1939 = scalar_lea.sflag [#allocation7], 1
    %1940 = vsyncpa %s1939, 1

</llo_original>
